<compile_context>
chip_gen: v5e
topology: v5e:2x2
jax: 0.10.0
libtpu: 0.0.40
codegen_flags: <defaults>
</compile_context>

<pallas_src>
import functools

import jax
import jax.numpy as jnp
from jax.experimental import pallas as pl
from jax.experimental.pallas import tpu as pltpu

SIZES = (36, 24, 16)  # (input_dim, hidden_dim, latent_dim)


def _round_up(n, m):
    return ((n + m - 1) // m) * m


def autoencoder_kernel(x_ref, w1_ref, b1_ref, w2_ref, b2_ref,
                       w3_ref, b3_ref, w4_ref, b4_ref, out_ref, *, mxu_dtype):
    """Fused encoder + decoder forward pass on a [TB, 36] batch-major tile.

    encoder: Linear(36->24) -> ReLU -> Linear(24->16) -> Tanh
    decoder: Linear(16->24) -> ReLU -> Linear(24->36) -> Tanh
    Weights are pre-transposed to [in, out]; biases are [1, out] (broadcast over
    the batch/sublane axis).  MXU operands use `mxu_dtype`; accumulation and all
    VPU/EUP math (bias add, ReLU, tanh) stay float32.
    """
    def linear(a, w_ref, b_ref):
        return jnp.dot(a.astype(mxu_dtype), w_ref[...],
                       preferred_element_type=jnp.float32) + b_ref[...]

    x = x_ref[...]                                           # [TB, 36] f32

    # ---- encoder ----
    h1 = jnp.maximum(linear(x, w1_ref, b1_ref), 0.0)         # [TB, 24]
    z = jnp.tanh(linear(h1, w2_ref, b2_ref))                 # [TB, 16]

    # ---- decoder ----
    h2 = jnp.maximum(linear(z, w3_ref, b3_ref), 0.0)         # [TB, 24]
    y = jnp.tanh(linear(h2, w4_ref, b4_ref))                 # [TB, 36]

    out_ref[...] = y.astype(out_ref.dtype)


@functools.partial(jax.jit, static_argnames=("tb", "use_bf16_mxu"))
def autoencoder_forward(x, params, *, tb=2048, use_bf16_mxu=False):
    """x: [B, 36] float32; params: PyTorch-layout weights [out, in], biases [out]."""
    B, in_dim = x.shape
    assert in_dim == SIZES[0]

    mxu_dtype = jnp.bfloat16 if use_bf16_mxu else jnp.float32

    # Pre-transpose the (tiny) weights once to [in, out]; biases to [1, out].
    w = [params[f"w{i}"].T.astype(mxu_dtype) for i in range(1, 5)]
    b = [params[f"b{i}"].reshape(1, -1).astype(jnp.float32) for i in range(1, 5)]

    # Batch tile: large for DMA efficiency / low per-step overhead (multiple of
    # 128 for full lane use), but capped so modest batches still give >= 2 grid
    # steps (v7x megacore + pipelining).  Ragged last block is handled by Pallas.
    TB = _round_up(tb, 128)
    half_b = _round_up(-(-B // 2), 128)
    TB = max(128, min(TB, half_b))
    num_tiles = pl.cdiv(B, TB)

    weight_bytes = sum(int(a.size) * a.dtype.itemsize for a in (*w, *b))
    flops_per_row = 2 * (36 * 24 + 24 * 16 + 16 * 24 + 24 * 36)      # = 4992
    cost = pl.CostEstimate(
        flops=flops_per_row * B,
        transcendentals=(SIZES[2] + SIZES[0]) * B,                   # two tanh layers
        bytes_accessed=2 * B * in_dim * x.dtype.itemsize + weight_bytes,
    )

    full = lambda a: pl.BlockSpec(a.shape, lambda i: (0, 0))         # resident params
    x_spec = pl.BlockSpec((TB, in_dim), lambda i: (i, 0))            # pipelined x
    out_spec = pl.BlockSpec((TB, in_dim), lambda i: (i, 0))          # pipelined out

    grid_spec = pltpu.PrefetchScalarGridSpec(
        num_scalar_prefetch=0,
        grid=(num_tiles,),
        in_specs=[x_spec,
                  full(w[0]), full(b[0]),
                  full(w[1]), full(b[1]),
                  full(w[2]), full(b[2]),
                  full(w[3]), full(b[3])],
        out_specs=out_spec,
    )

    out = pl.pallas_call(
        functools.partial(autoencoder_kernel, mxu_dtype=mxu_dtype),
        out_shape=jax.ShapeDtypeStruct((B, in_dim), jnp.float32),
        grid_spec=grid_spec,
        compiler_params=pltpu.CompilerParams(
            dimension_semantics=("parallel",)),
        cost_estimate=cost,
    )(x, w[0], b[0], w[1], b[1], w[2], b[2], w[3], b[3])

    return out


def init_params(key):
    """PyTorch-style init U(-1/sqrt(fan_in), 1/sqrt(fan_in)), PyTorch layout.

    Weights stored as [out, in]; biases as [out] (exactly like nn.Linear).
    """
    in_d, hid_d, lat_d = SIZES
    layer_dims = [(in_d, hid_d), (hid_d, lat_d),   # encoder
                  (lat_d, hid_d), (hid_d, in_d)]   # decoder
    params = {}
    keys = jax.random.split(key, 2 * len(layer_dims))
    for i, (fan_in, fan_out) in enumerate(layer_dims):
        bound = 1.0 / (float(fan_in) ** 0.5)
        params[f"w{i + 1}"] = jax.random.uniform(
            keys[2 * i], (fan_out, fan_in), dtype=jnp.float32,
            minval=-bound, maxval=bound)
        params[f"b{i + 1}"] = jax.random.uniform(
            keys[2 * i + 1], (fan_out,), dtype=jnp.float32,
            minval=-bound, maxval=bound)
    return params


def reference_forward(x, p):
    """Pure-JAX reference (standard [B, F] layout) for correctness checking."""
    h1 = jnp.maximum(x @ p["w1"].T + p["b1"], 0.0)
    z = jnp.tanh(h1 @ p["w2"].T + p["b2"])
    h2 = jnp.maximum(z @ p["w3"].T + p["b3"], 0.0)
    return jnp.tanh(h2 @ p["w4"].T + p["b4"])


if __name__ == "__main__":
    key = jax.random.PRNGKey(0)
    pkey, xkey = jax.random.split(key)

    params = init_params(pkey)

    # Small-but-nontrivial batch: the TB cap gives TB=256 -> 2 grid steps
    # (exercises the parallel/megacore path) plus a ragged last block
    # (300 = 256 + 44, OOB output rows masked by Pallas).
    batch = 300
    x = jax.random.normal(xkey, (batch, SIZES[0]), dtype=jnp.float32)

    ref = reference_forward(x, params)

    # Default path: f32 MXU operands, numerically faithful to the reference.
    out = jax.block_until_ready(autoencoder_forward(x, params))
    assert out.shape == (batch, SIZES[0])
    assert jnp.allclose(out, ref, atol=1e-5, rtol=1e-5), (
        float(jnp.max(jnp.abs(out - ref))))

    # bf16 MXU-operand path (perf lever from the review): f32 accumulation,
    # looser tolerance per the bf16 operand rounding.
    out_bf16 = jax.block_until_ready(
        autoencoder_forward(x, params, use_bf16_mxu=True))
    assert out_bf16.shape == (batch, SIZES[0])
    assert jnp.allclose(out_bf16, ref, atol=3e-2, rtol=3e-2), (
        float(jnp.max(jnp.abs(out_bf16 - ref))))

    print("KERNEL_OK")
</pallas_src>

<mosaic_0001>
module attributes {stable_mosaic.version = 11 : i64} {
  func.func @autoencoder_kernel(%arg0: i32, %arg1: memref<256x36xf32, #tpu.memory_space<vmem>>, %arg2: memref<36x24xf32, #tpu.memory_space<vmem>>, %arg3: memref<1x24xf32, #tpu.memory_space<vmem>>, %arg4: memref<24x16xf32, #tpu.memory_space<vmem>>, %arg5: memref<1x16xf32, #tpu.memory_space<vmem>>, %arg6: memref<16x24xf32, #tpu.memory_space<vmem>>, %arg7: memref<1x24xf32, #tpu.memory_space<vmem>>, %arg8: memref<24x36xf32, #tpu.memory_space<vmem>>, %arg9: memref<1x36xf32, #tpu.memory_space<vmem>>, %arg10: memref<256x36xf32, #tpu.memory_space<vmem>>) attributes {dimension_semantics = [#tpu.dimension_semantics<parallel>], iteration_bounds = array<i64: 2>, scalar_prefetch = 0 : i64, scratch_operands = 0 : i64, tpu.core_type = #tpu.core_type<tc>, window_params = [{transform_indices = @transform_0, window_bounds = array<i64: 256, 36>}, {pipeline_mode = #tpu.pipeline_mode<synchronous>, transform_indices = @transform_1, window_bounds = array<i64: 36, 24>}, {pipeline_mode = #tpu.pipeline_mode<synchronous>, transform_indices = @transform_2, window_bounds = array<i64: 1, 24>}, {pipeline_mode = #tpu.pipeline_mode<synchronous>, transform_indices = @transform_3, window_bounds = array<i64: 24, 16>}, {pipeline_mode = #tpu.pipeline_mode<synchronous>, transform_indices = @transform_4, window_bounds = array<i64: 1, 16>}, {pipeline_mode = #tpu.pipeline_mode<synchronous>, transform_indices = @transform_5, window_bounds = array<i64: 16, 24>}, {pipeline_mode = #tpu.pipeline_mode<synchronous>, transform_indices = @transform_6, window_bounds = array<i64: 1, 24>}, {pipeline_mode = #tpu.pipeline_mode<synchronous>, transform_indices = @transform_7, window_bounds = array<i64: 24, 36>}, {pipeline_mode = #tpu.pipeline_mode<synchronous>, transform_indices = @transform_8, window_bounds = array<i64: 1, 36>}, {transform_indices = @transform_9, window_bounds = array<i64: 256, 36>}]} {
    %c0 = arith.constant 0 : index
    %c0_0 = arith.constant 0 : index
    %0 = vector.load %arg1[%c0, %c0_0] : memref<256x36xf32, #tpu.memory_space<vmem>>, vector<256x36xf32>
    %c0_1 = arith.constant 0 : index
    %c0_2 = arith.constant 0 : index
    %1 = vector.load %arg2[%c0_1, %c0_2] : memref<36x24xf32, #tpu.memory_space<vmem>>, vector<36x24xf32>
    %cst = arith.constant dense<0.000000e+00> : vector<256x24xf32>
    %2 = tpu.matmul %0, %1, %cst {dimension_numbers = #tpu.dot_dimension_numbers<[1], [0], [0], [1], [0, 0, 1, 1], [], []>} : vector<256x36xf32>, vector<36x24xf32>, vector<256x24xf32> -> vector<256x24xf32>
    %c0_3 = arith.constant 0 : index
    %c0_4 = arith.constant 0 : index
    %3 = vector.load %arg3[%c0_3, %c0_4] : memref<1x24xf32, #tpu.memory_space<vmem>>, vector<1x24xf32>
    %4 = vector.broadcast %3 : vector<1x24xf32> to vector<256x24xf32>
    %5 = arith.addf %2, %4 : vector<256x24xf32>
    %cst_5 = arith.constant 0.000000e+00 : f32
    %6 = vector.broadcast %cst_5 : f32 to vector<256x24xf32>
    %7 = arith.maximumf %5, %6 : vector<256x24xf32>
    %c0_6 = arith.constant 0 : index
    %c0_7 = arith.constant 0 : index
    %8 = vector.load %arg4[%c0_6, %c0_7] : memref<24x16xf32, #tpu.memory_space<vmem>>, vector<24x16xf32>
    %cst_8 = arith.constant dense<0.000000e+00> : vector<256x16xf32>
    %9 = tpu.matmul %7, %8, %cst_8 {dimension_numbers = #tpu.dot_dimension_numbers<[1], [0], [0], [1], [0, 0, 1, 1], [], []>} : vector<256x24xf32>, vector<24x16xf32>, vector<256x16xf32> -> vector<256x16xf32>
    %c0_9 = arith.constant 0 : index
    %c0_10 = arith.constant 0 : index
    %10 = vector.load %arg5[%c0_9, %c0_10] : memref<1x16xf32, #tpu.memory_space<vmem>>, vector<1x16xf32>
    %11 = vector.broadcast %10 : vector<1x16xf32> to vector<256x16xf32>
    %12 = arith.addf %9, %11 : vector<256x16xf32>
    %13 = math.tanh %12 : vector<256x16xf32>
    %c0_11 = arith.constant 0 : index
    %c0_12 = arith.constant 0 : index
    %14 = vector.load %arg6[%c0_11, %c0_12] : memref<16x24xf32, #tpu.memory_space<vmem>>, vector<16x24xf32>
    %cst_13 = arith.constant dense<0.000000e+00> : vector<256x24xf32>
    %15 = tpu.matmul %13, %14, %cst_13 {dimension_numbers = #tpu.dot_dimension_numbers<[1], [0], [0], [1], [0, 0, 1, 1], [], []>} : vector<256x16xf32>, vector<16x24xf32>, vector<256x24xf32> -> vector<256x24xf32>
    %c0_14 = arith.constant 0 : index
    %c0_15 = arith.constant 0 : index
    %16 = vector.load %arg7[%c0_14, %c0_15] : memref<1x24xf32, #tpu.memory_space<vmem>>, vector<1x24xf32>
    %17 = vector.broadcast %16 : vector<1x24xf32> to vector<256x24xf32>
    %18 = arith.addf %15, %17 : vector<256x24xf32>
    %cst_16 = arith.constant 0.000000e+00 : f32
    %19 = vector.broadcast %cst_16 : f32 to vector<256x24xf32>
    %20 = arith.maximumf %18, %19 : vector<256x24xf32>
    %c0_17 = arith.constant 0 : index
    %c0_18 = arith.constant 0 : index
    %21 = vector.load %arg8[%c0_17, %c0_18] : memref<24x36xf32, #tpu.memory_space<vmem>>, vector<24x36xf32>
    %cst_19 = arith.constant dense<0.000000e+00> : vector<256x36xf32>
    %22 = tpu.matmul %20, %21, %cst_19 {dimension_numbers = #tpu.dot_dimension_numbers<[1], [0], [0], [1], [0, 0, 1, 1], [], []>} : vector<256x24xf32>, vector<24x36xf32>, vector<256x36xf32> -> vector<256x36xf32>
    %c0_20 = arith.constant 0 : index
    %c0_21 = arith.constant 0 : index
    %23 = vector.load %arg9[%c0_20, %c0_21] : memref<1x36xf32, #tpu.memory_space<vmem>>, vector<1x36xf32>
    %24 = vector.broadcast %23 : vector<1x36xf32> to vector<256x36xf32>
    %25 = arith.addf %22, %24 : vector<256x36xf32>
    %26 = math.tanh %25 : vector<256x36xf32>
    %c0_22 = arith.constant 0 : index
    %c0_23 = arith.constant 0 : index
    %27 = vector.load %arg10[%c0_22, %c0_23] : memref<256x36xf32, #tpu.memory_space<vmem>>, vector<256x36xf32>
    tpu.vector_store %arg10[%c0_22, %c0_23], %26 {strides = array<i32>} : memref<256x36xf32, #tpu.memory_space<vmem>>, vector<256x36xf32>,
    return
  }
  func.func @transform_0(%arg0: i32) -> (i32, i32) {
    %c0_i32 = arith.constant 0 : i32
    %c0_i32_0 = arith.constant 0 : i32
    return %arg0, %c0_i32 : i32, i32
  }
  func.func @transform_1(%arg0: i32) -> (i32, i32) {
    %c0_i32 = arith.constant 0 : i32
    %c0_i32_0 = arith.constant 0 : i32
    %c0_i32_1 = arith.constant 0 : i32
    return %c0_i32, %c0_i32_0 : i32, i32
  }
  func.func @transform_2(%arg0: i32) -> (i32, i32) {
    %c0_i32 = arith.constant 0 : i32
    %c0_i32_0 = arith.constant 0 : i32
    %c0_i32_1 = arith.constant 0 : i32
    return %c0_i32, %c0_i32_0 : i32, i32
  }
  func.func @transform_3(%arg0: i32) -> (i32, i32) {
    %c0_i32 = arith.constant 0 : i32
    %c0_i32_0 = arith.constant 0 : i32
    %c0_i32_1 = arith.constant 0 : i32
    return %c0_i32, %c0_i32_0 : i32, i32
  }
  func.func @transform_4(%arg0: i32) -> (i32, i32) {
    %c0_i32 = arith.constant 0 : i32
    %c0_i32_0 = arith.constant 0 : i32
    %c0_i32_1 = arith.constant 0 : i32
    return %c0_i32, %c0_i32_0 : i32, i32
  }
  func.func @transform_5(%arg0: i32) -> (i32, i32) {
    %c0_i32 = arith.constant 0 : i32
    %c0_i32_0 = arith.constant 0 : i32
    %c0_i32_1 = arith.constant 0 : i32
    return %c0_i32, %c0_i32_0 : i32, i32
  }
  func.func @transform_6(%arg0: i32) -> (i32, i32) {
    %c0_i32 = arith.constant 0 : i32
    %c0_i32_0 = arith.constant 0 : i32
    %c0_i32_1 = arith.constant 0 : i32
    return %c0_i32, %c0_i32_0 : i32, i32
  }
  func.func @transform_7(%arg0: i32) -> (i32, i32) {
    %c0_i32 = arith.constant 0 : i32
    %c0_i32_0 = arith.constant 0 : i32
    %c0_i32_1 = arith.constant 0 : i32
    return %c0_i32, %c0_i32_0 : i32, i32
  }
  func.func @transform_8(%arg0: i32) -> (i32, i32) {
    %c0_i32 = arith.constant 0 : i32
    %c0_i32_0 = arith.constant 0 : i32
    %c0_i32_1 = arith.constant 0 : i32
    return %c0_i32, %c0_i32_0 : i32, i32
  }
  func.func @transform_9(%arg0: i32) -> (i32, i32) {
    %c0_i32 = arith.constant 0 : i32
    %c0_i32_0 = arith.constant 0 : i32
    return %arg0, %c0_i32 : i32, i32
  }
}

</mosaic_0001>

<llo_original>
// kernel: autoencoder_forward.1
$region0: #{autoencoder_forward.1}
  #allocation0 [shape = 'u32[]', space=smem, size = 0x4, offset = 0x4, fixed_abs, tag = 'smem constant byte address 0x4 - core index']
  #allocation1 [shape = 'u32[72,128]{1,0:T(1,128)}', space=vmem, size = 0x9000, scoped, tag = 'internal scratch']
  %s0 = inlined_call_operand.vmem [shape: f32[300,36], index: 0, kind: input, shape index: {}]
  %s1 = inlined_call_operand.vmem [shape: f32[36,24], index: 1, kind: input, shape index: {}]
  %s2 = inlined_call_operand.vmem [shape: f32[1,24], index: 2, kind: input, shape index: {}]
  %s3 = inlined_call_operand.vmem [shape: f32[24,16], index: 3, kind: input, shape index: {}]
  %s4 = inlined_call_operand.vmem [shape: f32[1,16], index: 4, kind: input, shape index: {}]
  %s5 = inlined_call_operand.vmem [shape: f32[16,24], index: 5, kind: input, shape index: {}]
  %s6 = inlined_call_operand.vmem [shape: f32[1,24], index: 6, kind: input, shape index: {}]
  %s7 = inlined_call_operand.vmem [shape: f32[24,36], index: 7, kind: input, shape index: {}]
  %s8 = inlined_call_operand.vmem [shape: f32[1,36], index: 8, kind: input, shape index: {}]
  %s9 = inlined_call_operand.vmem [shape: f32[300,36], index: 9, kind: output, shape index: {}]
  %s10 = sld [smem:[#allocation0]]
  $region117: #{autoencoder_forward.1} parent=0
    _
  %s12 = ssub.s32 1, %s10
  %s13 = scalar_select 0, %s12, %s10
  $region1: #{autoencoder_forward.1} parent=0
    #allocation2 [shape = 'u8[262144]{0}', space=vmem, size = 0x40000, scoped, tag = 'output window, operand 0']
    loop: start=0, step=1, limit=4
    $region2: #{autoencoder_forward.1} parent=1 // loop_pre_header
      _
    $region3: #{autoencoder_forward.1} parent=1 // loop_header
      %s15 = sphi 0, %s19
      %p16 = scmp.ge.s32.totalorder %s15, 4
      %s25 = sphi 0, %s27
      %s28 = sphi 0, %s25
      %s29 = sphi 0, %s28
      %s45 = sphi 0, %s29
      %s49 = sphi 0, %s49
      %s51 = sphi 0, %s49
      %s52 = sphi 0, %s51
      %s66 = sphi 0, %s52
      %s70 = sphi 0, %s70
      %s72 = sphi 0, %s70
      %s73 = sphi 0, %s72
      %s87 = sphi 0, %s73
      %s91 = sphi 0, %s91
      %s93 = sphi 0, %s91
      %s94 = sphi 0, %s93
      %s108 = sphi 0, %s94
      %s112 = sphi 0, %s112
      %s114 = sphi 0, %s112
      %s115 = sphi 0, %s114
      %s129 = sphi 0, %s115
      %s133 = sphi 0, %s133
      %s135 = sphi 0, %s133
      %s136 = sphi 0, %s135
      %s150 = sphi 0, %s136
      %s154 = sphi 0, %s154
      %s156 = sphi 0, %s154
      %s157 = sphi 0, %s156
      %s171 = sphi 0, %s157
      %s175 = sphi 0, %s175
      %s177 = sphi 0, %s175
      %s178 = sphi 0, %s177
      %s192 = sphi 0, %s178
      %s196 = sphi 0, %s196
      %s198 = sphi 0, %s196
      %s199 = sphi 0, %s198
      %s213 = sphi 0, %s199
      %s219 = sphi 0, %s221
      %s222 = sphi 0, %s219
      %s223 = sphi 0, %s222
      %s239 = sphi 0, %s223
    $region4: #{autoencoder_forward.1} parent=1 // loop_header_branch
      %18 = sbr.rel (%p16) target = $region8
    $region5: #{autoencoder_forward.1} parent=1 // loop_body
      %s20 = ssub.s32 %s15, 1
      %s21 = ssub.s32 %s15, 2
      %s22 = sadd.s32 %s15, 1
      %s23 = ssub.s32 %s15, %s22
      %p24 = scmp.eq.s32.totalorder %s23, 0
      %s26 = sadd.s32 %s25, 1
      %s27 = scalar_select %p24, %s25, %s26
      %p30 = pneg %p24
      %p31 = scmp.eq.s32.totalorder %s15, 1
      %p32 = por %p30, %p31
      %p33 = scmp.ne.s32.totalorder %s25, %s28
      %p34 = scmp.eq.s32.totalorder %s15, 0
      %p35 = por %p33, %p34
      %p36 = scmp.ne.s32.totalorder %s25, %s28
      %p37 = scmp.eq.s32.totalorder %s20, 1
      %p38 = por %p36, %p37
      %p39 = scmp.ne.s32.totalorder %s28, %s29
      %p40 = scmp.eq.s32.totalorder %s20, 0
      %p41 = por %p39, %p40
      %p42 = scmp.ne.s32.totalorder %s28, %s29
      %p43 = scmp.eq.s32.totalorder %s21, 1
      %p44 = por %p42, %p43
      %p46 = scmp.ne.s32.totalorder %s29, %s45
      %p47 = scmp.eq.s32.totalorder %s21, 0
      %p48 = por %p46, %p47
      %s50 = sadd.s32 %s49, 1
      %p53 = scmp.eq.s32.totalorder %s15, 1
      %p54 = scmp.ne.s32.totalorder %s49, %s51
      %p55 = scmp.eq.s32.totalorder %s15, 0
      %p56 = por %p54, %p55
      %p57 = scmp.ne.s32.totalorder %s49, %s51
      %p58 = scmp.eq.s32.totalorder %s20, 1
      %p59 = por %p57, %p58
      %p60 = scmp.ne.s32.totalorder %s51, %s52
      %p61 = scmp.eq.s32.totalorder %s20, 0
      %p62 = por %p60, %p61
      %p63 = scmp.ne.s32.totalorder %s51, %s52
      %p64 = scmp.eq.s32.totalorder %s21, 1
      %p65 = por %p63, %p64
      %p67 = scmp.ne.s32.totalorder %s52, %s66
      %p68 = scmp.eq.s32.totalorder %s21, 0
      %p69 = por %p67, %p68
      %s71 = sadd.s32 %s70, 1
      %p74 = scmp.eq.s32.totalorder %s15, 1
      %p75 = scmp.ne.s32.totalorder %s70, %s72
      %p76 = scmp.eq.s32.totalorder %s15, 0
      %p77 = por %p75, %p76
      %p78 = scmp.ne.s32.totalorder %s70, %s72
      %p79 = scmp.eq.s32.totalorder %s20, 1
      %p80 = por %p78, %p79
      %p81 = scmp.ne.s32.totalorder %s72, %s73
      %p82 = scmp.eq.s32.totalorder %s20, 0
      %p83 = por %p81, %p82
      %p84 = scmp.ne.s32.totalorder %s72, %s73
      %p85 = scmp.eq.s32.totalorder %s21, 1
      %p86 = por %p84, %p85
      %p88 = scmp.ne.s32.totalorder %s73, %s87
      %p89 = scmp.eq.s32.totalorder %s21, 0
      %p90 = por %p88, %p89
      %s92 = sadd.s32 %s91, 1
      %p95 = scmp.eq.s32.totalorder %s15, 1
      %p96 = scmp.ne.s32.totalorder %s91, %s93
      %p97 = scmp.eq.s32.totalorder %s15, 0
      %p98 = por %p96, %p97
      %p99 = scmp.ne.s32.totalorder %s91, %s93
      %p100 = scmp.eq.s32.totalorder %s20, 1
      %p101 = por %p99, %p100
      %p102 = scmp.ne.s32.totalorder %s93, %s94
      %p103 = scmp.eq.s32.totalorder %s20, 0
      %p104 = por %p102, %p103
      %p105 = scmp.ne.s32.totalorder %s93, %s94
      %p106 = scmp.eq.s32.totalorder %s21, 1
      %p107 = por %p105, %p106
      %p109 = scmp.ne.s32.totalorder %s94, %s108
      %p110 = scmp.eq.s32.totalorder %s21, 0
      %p111 = por %p109, %p110
      %s113 = sadd.s32 %s112, 1
      %p116 = scmp.eq.s32.totalorder %s15, 1
      %p117 = scmp.ne.s32.totalorder %s112, %s114
      %p118 = scmp.eq.s32.totalorder %s15, 0
      %p119 = por %p117, %p118
      %p120 = scmp.ne.s32.totalorder %s112, %s114
      %p121 = scmp.eq.s32.totalorder %s20, 1
      %p122 = por %p120, %p121
      %p123 = scmp.ne.s32.totalorder %s114, %s115
      %p124 = scmp.eq.s32.totalorder %s20, 0
      %p125 = por %p123, %p124
      %p126 = scmp.ne.s32.totalorder %s114, %s115
      %p127 = scmp.eq.s32.totalorder %s21, 1
      %p128 = por %p126, %p127
      %p130 = scmp.ne.s32.totalorder %s115, %s129
      %p131 = scmp.eq.s32.totalorder %s21, 0
      %p132 = por %p130, %p131
      %s134 = sadd.s32 %s133, 1
      %p137 = scmp.eq.s32.totalorder %s15, 1
      %p138 = scmp.ne.s32.totalorder %s133, %s135
      %p139 = scmp.eq.s32.totalorder %s15, 0
      %p140 = por %p138, %p139
      %p141 = scmp.ne.s32.totalorder %s133, %s135
      %p142 = scmp.eq.s32.totalorder %s20, 1
      %p143 = por %p141, %p142
      %p144 = scmp.ne.s32.totalorder %s135, %s136
      %p145 = scmp.eq.s32.totalorder %s20, 0
      %p146 = por %p144, %p145
      %p147 = scmp.ne.s32.totalorder %s135, %s136
      %p148 = scmp.eq.s32.totalorder %s21, 1
      %p149 = por %p147, %p148
      %p151 = scmp.ne.s32.totalorder %s136, %s150
      %p152 = scmp.eq.s32.totalorder %s21, 0
      %p153 = por %p151, %p152
      %s155 = sadd.s32 %s154, 1
      %p158 = scmp.eq.s32.totalorder %s15, 1
      %p159 = scmp.ne.s32.totalorder %s154, %s156
      %p160 = scmp.eq.s32.totalorder %s15, 0
      %p161 = por %p159, %p160
      %p162 = scmp.ne.s32.totalorder %s154, %s156
      %p163 = scmp.eq.s32.totalorder %s20, 1
      %p164 = por %p162, %p163
      %p165 = scmp.ne.s32.totalorder %s156, %s157
      %p166 = scmp.eq.s32.totalorder %s20, 0
      %p167 = por %p165, %p166
      %p168 = scmp.ne.s32.totalorder %s156, %s157
      %p169 = scmp.eq.s32.totalorder %s21, 1
      %p170 = por %p168, %p169
      %p172 = scmp.ne.s32.totalorder %s157, %s171
      %p173 = scmp.eq.s32.totalorder %s21, 0
      %p174 = por %p172, %p173
      %s176 = sadd.s32 %s175, 1
      %p179 = scmp.eq.s32.totalorder %s15, 1
      %p180 = scmp.ne.s32.totalorder %s175, %s177
      %p181 = scmp.eq.s32.totalorder %s15, 0
      %p182 = por %p180, %p181
      %p183 = scmp.ne.s32.totalorder %s175, %s177
      %p184 = scmp.eq.s32.totalorder %s20, 1
      %p185 = por %p183, %p184
      %p186 = scmp.ne.s32.totalorder %s177, %s178
      %p187 = scmp.eq.s32.totalorder %s20, 0
      %p188 = por %p186, %p187
      %p189 = scmp.ne.s32.totalorder %s177, %s178
      %p190 = scmp.eq.s32.totalorder %s21, 1
      %p191 = por %p189, %p190
      %p193 = scmp.ne.s32.totalorder %s178, %s192
      %p194 = scmp.eq.s32.totalorder %s21, 0
      %p195 = por %p193, %p194
      %s197 = sadd.s32 %s196, 1
      %p200 = scmp.eq.s32.totalorder %s15, 1
      %p201 = scmp.ne.s32.totalorder %s196, %s198
      %p202 = scmp.eq.s32.totalorder %s15, 0
      %p203 = por %p201, %p202
      %p204 = scmp.ne.s32.totalorder %s196, %s198
      %p205 = scmp.eq.s32.totalorder %s20, 1
      %p206 = por %p204, %p205
      %p207 = scmp.ne.s32.totalorder %s198, %s199
      %p208 = scmp.eq.s32.totalorder %s20, 0
      %p209 = por %p207, %p208
      %p210 = scmp.ne.s32.totalorder %s198, %s199
      %p211 = scmp.eq.s32.totalorder %s21, 1
      %p212 = por %p210, %p211
      %p214 = scmp.ne.s32.totalorder %s199, %s213
      %p215 = scmp.eq.s32.totalorder %s21, 0
      %p216 = por %p214, %p215
      %s217 = ssub.s32 %s15, %s22
      %p218 = scmp.eq.s32.totalorder %s217, 0
      %s220 = sadd.s32 %s219, 1
      %s221 = scalar_select %p218, %s219, %s220
      %p224 = pneg %p218
      %p225 = scmp.eq.s32.totalorder %s15, 1
      %p226 = por %p224, %p225
      %p227 = scmp.ne.s32.totalorder %s219, %s222
      %p228 = scmp.eq.s32.totalorder %s15, 0
      %p229 = por %p227, %p228
      %p230 = scmp.ne.s32.totalorder %s219, %s222
      %p231 = scmp.eq.s32.totalorder %s20, 1
      %p232 = por %p230, %p231
      %p233 = scmp.ne.s32.totalorder %s222, %s223
      %p234 = scmp.eq.s32.totalorder %s20, 0
      %p235 = por %p233, %p234
      %p236 = scmp.ne.s32.totalorder %s222, %s223
      %p237 = scmp.eq.s32.totalorder %s21, 1
      %p238 = por %p236, %p237
      %p240 = scmp.ne.s32.totalorder %s223, %s239
      %p241 = scmp.eq.s32.totalorder %s21, 0
      %p242 = por %p240, %p241
      %p243 = scmp.le.s32.totalorder 1, %s15
      %p244 = scmp.lt.s32.totalorder %s15, 3
      %p245 = pnand %p243, %p244
      %p246 = pneg %p245
      // Predicated region
      $region9: #{autoencoder_forward.1} parent=5 // pred_check
        _
      $region10: #{autoencoder_forward.1} parent=5 // pred_check_branch
        %248 = sbr.rel (%p245) target = $region12
      $region11: #{autoencoder_forward.1} parent=5 // pred_region
        %s249 = ssub.s32 %s15, 1
        // Predicated region
        $region13: #{autoencoder_forward.1} parent=11 // pred_check
          %p250 = pneg %p62
        $region14: #{autoencoder_forward.1} parent=11 // pred_check_branch
          %252 = sbr.rel (%p250) target = $region16
        $region15: #{autoencoder_forward.1} parent=11 // pred_region
          _
        $region16: #{autoencoder_forward.1} parent=11 // pred_fallthru
          _
        // Predicated region
        $region17: #{autoencoder_forward.1} parent=11 // pred_check
          %p253 = pneg %p83
        $region18: #{autoencoder_forward.1} parent=11 // pred_check_branch
          %255 = sbr.rel (%p253) target = $region20
        $region19: #{autoencoder_forward.1} parent=11 // pred_region
          _
        $region20: #{autoencoder_forward.1} parent=11 // pred_fallthru
          _
        // Predicated region
        $region21: #{autoencoder_forward.1} parent=11 // pred_check
          %p256 = pneg %p104
        $region22: #{autoencoder_forward.1} parent=11 // pred_check_branch
          %258 = sbr.rel (%p256) target = $region24
        $region23: #{autoencoder_forward.1} parent=11 // pred_region
          _
        $region24: #{autoencoder_forward.1} parent=11 // pred_fallthru
          _
        // Predicated region
        $region25: #{autoencoder_forward.1} parent=11 // pred_check
          %p259 = pneg %p125
        $region26: #{autoencoder_forward.1} parent=11 // pred_check_branch
          %261 = sbr.rel (%p259) target = $region28
        $region27: #{autoencoder_forward.1} parent=11 // pred_region
          _
        $region28: #{autoencoder_forward.1} parent=11 // pred_fallthru
          _
        // Predicated region
        $region29: #{autoencoder_forward.1} parent=11 // pred_check
          %p262 = pneg %p146
        $region30: #{autoencoder_forward.1} parent=11 // pred_check_branch
          %264 = sbr.rel (%p262) target = $region32
        $region31: #{autoencoder_forward.1} parent=11 // pred_region
          _
        $region32: #{autoencoder_forward.1} parent=11 // pred_fallthru
          _
        // Predicated region
        $region33: #{autoencoder_forward.1} parent=11 // pred_check
          %p265 = pneg %p167
        $region34: #{autoencoder_forward.1} parent=11 // pred_check_branch
          %267 = sbr.rel (%p265) target = $region36
        $region35: #{autoencoder_forward.1} parent=11 // pred_region
          _
        $region36: #{autoencoder_forward.1} parent=11 // pred_fallthru
          _
        // Predicated region
        $region37: #{autoencoder_forward.1} parent=11 // pred_check
          %p268 = pneg %p188
        $region38: #{autoencoder_forward.1} parent=11 // pred_check_branch
          %270 = sbr.rel (%p268) target = $region40
        $region39: #{autoencoder_forward.1} parent=11 // pred_region
          _
        $region40: #{autoencoder_forward.1} parent=11 // pred_fallthru
          _
        // Predicated region
        $region41: #{autoencoder_forward.1} parent=11 // pred_check
          %p271 = pneg %p209
        $region42: #{autoencoder_forward.1} parent=11 // pred_check_branch
          %273 = sbr.rel (%p271) target = $region44
        $region43: #{autoencoder_forward.1} parent=11 // pred_region
          _
        $region44: #{autoencoder_forward.1} parent=11 // pred_fallthru
          _
      $region12: #{autoencoder_forward.1} parent=5 // pred_fallthru
        _
      %p274 = scmp.lt.s32.totalorder %s15, 2
      // Predicated region
      $region45: #{autoencoder_forward.1} parent=5 // pred_check
        %p275 = pneg %p274
      $region46: #{autoencoder_forward.1} parent=5 // pred_check_branch
        %277 = sbr.rel (%p275) target = $region48
      $region47: #{autoencoder_forward.1} parent=5 // pred_region
        // Predicated region
        $region49: #{autoencoder_forward.1} parent=47 // pred_check
          %p278 = pneg %p35
        $region50: #{autoencoder_forward.1} parent=47 // pred_check_branch
          %280 = sbr.rel (%p278) target = $region52
        $region51: #{autoencoder_forward.1} parent=47 // pred_region
          %s281 = smul.u32 32, %s15
          %s282 = ssub.s32 38, %s281
          %p283 = scmp.lt.s32.totalorder %s282, 32
          %s284 = scalar_select %p283, %s282, 32
          %s285 = smul.u32 8, %s284
          %p286 = scmp.lt.s32.totalorder %s281, 37
          %s287 = scalar_select %p286, %s281, 37
          %s288 = smul.addr %s287, 8
          %s289 = scalar_lea.vmem %s0, %s288
          %s290 = smul.u32 32, %s15
          %s291 = ssub.s32 38, %s290
          %p292 = scmp.lt.s32.totalorder %s291, 32
          %s293 = scalar_select %p292, %s291, 32
          %s294 = smul.u32 8, %s293
        $region52: #{autoencoder_forward.1} parent=47 // pred_fallthru
          _
      $region48: #{autoencoder_forward.1} parent=5 // pred_fallthru
        _
      %p295 = scmp.le.s32.totalorder 1, %s15
      %p296 = scmp.lt.s32.totalorder %s15, 3
      %p297 = pnand %p295, %p296
      %p298 = pneg %p297
      // Predicated region
      $region53: #{autoencoder_forward.1} parent=5 // pred_check
        _
      $region54: #{autoencoder_forward.1} parent=5 // pred_check_branch
        %300 = sbr.rel (%p297) target = $region56
      $region55: #{autoencoder_forward.1} parent=5 // pred_region
        %s301 = ssub.s32 %s15, 1
        %s302 = smul.u32 32, %s20
        %s303 = ssub.s32 38, %s302
        %p304 = scmp.lt.s32.totalorder %s303, 32
        %s305 = scalar_select %p304, %s303, 32
        %s306 = smul.u32 8, %s305
        %p307 = scmp.lt.s32.totalorder %s302, 37
        %s308 = scalar_select %p307, %s302, 37
        %s309 = smul.addr %s308, 8
        %s310 = scalar_lea.vmem %s0, %s309
        %p311 = pneg %p41
        %p312 = pneg %p38
        %p313 = pneg %p62
        %p314 = pneg %p59
        %p315 = pneg %p83
        %p316 = pneg %p80
        %p317 = pneg %p104
        %p318 = pneg %p101
        %p319 = pneg %p125
        %p320 = pneg %p122
        %p321 = pneg %p146
        %p322 = pneg %p143
        %p323 = pneg %p167
        %p324 = pneg %p164
        %p325 = pneg %p188
        %p326 = pneg %p185
        %p327 = pneg %p209
        %p328 = pneg %p206
        %p329 = pneg %p235
        %p330 = pneg %p232
        %s331 = sand.u32 %s222, 1
        %s332 = sand.u32 %s222, 1
        %s333 = smul.addr %s332, 256
        %s334 = scalar_lea.vmem [#allocation2], %s333
        %s335 = smul.u32 32, %s20
        %s336 = ssub.s32 38, %s335
        %p337 = scmp.lt.s32.totalorder %s336, 32
        %s338 = scalar_select %p337, %s336, 32
        %s339 = smul.u32 8, %s338
        %p340 = scmp.lt.s32.totalorder %s335, 37
        %s341 = scalar_select %p340, %s335, 37
        %s342 = smul.addr %s341, 8
        %s343 = scalar_lea.vmem %s0, %s342
        %s344 = smul.u32 32, %s20
        %s345 = ssub.s32 38, %s344
        %p346 = scmp.lt.s32.totalorder %s345, 32
        %s347 = scalar_select %p346, %s345, 32
        %s348 = smul.u32 8, %s347
        %s349 = smul.u32 32, %s20
        %s350 = ssub.s32 38, %s349
        %p351 = scmp.lt.s32.totalorder %s350, 32
        %s352 = scalar_select %p351, %s350, 32
        %s353 = smul.u32 8, %s352
        %v354 = vld [vmem:[%s343] sm:$0xff]
        %v355 = vld [vmem:[%s343 + $0x8] sm:$0xff]
        %v356 = vld [vmem:[%s343 + $0x10] sm:$0xff]
        %v357 = vld [vmem:[%s343 + $0x18] sm:$0xff]
        %v358 = vld [vmem:[%s343 + $0x20] sm:$0xff]
        %v359 = vld [vmem:[%s343 + $0x28] sm:$0xff]
        %v360 = vld [vmem:[%s343 + $0x30] sm:$0xff]
        %v361 = vld [vmem:[%s343 + $0x38] sm:$0xff]
        %v362 = vld [vmem:[%s343 + $0x40] sm:$0xff]
        %v363 = vld [vmem:[%s343 + $0x48] sm:$0xff]
        %v364 = vld [vmem:[%s343 + $0x50] sm:$0xff]
        %v365 = vld [vmem:[%s343 + $0x58] sm:$0xff]
        %v366 = vld [vmem:[%s343 + $0x60] sm:$0xff]
        %v367 = vld [vmem:[%s343 + $0x68] sm:$0xff]
        %v368 = vld [vmem:[%s343 + $0x70] sm:$0xff]
        %v369 = vld [vmem:[%s343 + $0x78] sm:$0xff]
        %v370 = vld [vmem:[%s343 + $0x80] sm:$0xff]
        %v371 = vld [vmem:[%s343 + $0x88] sm:$0xff]
        %v372 = vld [vmem:[%s343 + $0x90] sm:$0xff]
        %v373 = vld [vmem:[%s343 + $0x98] sm:$0xff]
        %v374 = vld [vmem:[%s343 + $0xa0] sm:$0xff]
        %v375 = vld [vmem:[%s343 + $0xa8] sm:$0xff]
        %v376 = vld [vmem:[%s343 + $0xb0] sm:$0xff]
        %v377 = vld [vmem:[%s343 + $0xb8] sm:$0xff]
        %v378 = vld [vmem:[%s343 + $0xc0] sm:$0xff]
        %v379 = vld [vmem:[%s343 + $0xc8] sm:$0xff]
        %v380 = vld [vmem:[%s343 + $0xd0] sm:$0xff]
        %v381 = vld [vmem:[%s343 + $0xd8] sm:$0xff]
        %v382 = vld [vmem:[%s343 + $0xe0] sm:$0xff]
        %v383 = vld [vmem:[%s343 + $0xe8] sm:$0xff]
        %v384 = vld [vmem:[%s343 + $0xf0] sm:$0xff]
        %v385 = vld [vmem:[%s343 + $0xf8] sm:$0xff]
        %v386 = vld [vmem:[%s1] sm:$0xff]
        %v387 = vld [vmem:[%s1 + $0x8] sm:$0xff]
        %v388 = vld [vmem:[%s1 + $0x10] sm:$0xff]
        %v389 = vld [vmem:[%s1 + $0x18] sm:$0xff]
        %v390 = vld [vmem:[%s1 + $0x20] sm:$0xf]
        %v391 = vld [vmem:[%s2] sm:$0x1]
        %v393 = vperm.slane %v391, 0
        %vm395 = vcmask 293888
        %v397 = vsel %vm395, %v354, 0
        %v400 = vsel %vm395, %v355, 0
        %v403 = vsel %vm395, %v356, 0
        %v406 = vsel %vm395, %v357, 0
        %v409 = vsel %vm395, %v358, 0
        %v412 = vsel %vm395, %v359, 0
        %v415 = vsel %vm395, %v360, 0
        %v418 = vsel %vm395, %v361, 0
        %v421 = vsel %vm395, %v362, 0
        %v424 = vsel %vm395, %v363, 0
        %v427 = vsel %vm395, %v364, 0
        %v430 = vsel %vm395, %v365, 0
        %v433 = vsel %vm395, %v366, 0
        %v436 = vsel %vm395, %v367, 0
        %v439 = vsel %vm395, %v368, 0
        %v442 = vsel %vm395, %v369, 0
        %v445 = vsel %vm395, %v370, 0
        %v448 = vsel %vm395, %v371, 0
        %v451 = vsel %vm395, %v372, 0
        %v454 = vsel %vm395, %v373, 0
        %v457 = vsel %vm395, %v374, 0
        %v460 = vsel %vm395, %v375, 0
        %v463 = vsel %vm395, %v376, 0
        %v466 = vsel %vm395, %v377, 0
        %v469 = vsel %vm395, %v378, 0
        %v472 = vsel %vm395, %v379, 0
        %v475 = vsel %vm395, %v380, 0
        %v478 = vsel %vm395, %v381, 0
        %v481 = vsel %vm395, %v382, 0
        %v484 = vsel %vm395, %v383, 0
        %v487 = vsel %vm395, %v384, 0
        %v490 = vsel %vm395, %v385, 0
        %vm492 = vcmask 1043456
        %v494 = vsel %vm492, %v390, 0
        %496 = vmatpush.msra.mxu0 0.0
        %497 = vmatpush.msra.mxu0 0.0
        %498 = vmatpush.msra.mxu0 0.0
        %499 = vmatpush.msra.mxu0 0.0
        %500 = vmatpush.msra.mxu0 0.0
        %501 = vmatpush.msra.mxu0 0.0
        %502 = vmatpush.msra.mxu0 0.0
        %503 = vmatpush.msra.mxu0 0.0
        %504 = vmatpush.msra.mxu0 0.0
        %505 = vmatpush.msra.mxu0 0.0
        %506 = vmatpush.msra.mxu0 0.0
        %507 = vmatpush.msra.mxu0 %v494
        %508 = vmatpush.msra.mxu0 %v389
        %509 = vmatpush.msra.mxu0 %v388
        %510 = vmatpush.msra.mxu0 %v387
        %511 = vmatpush.msra.mxu0 %v386
        %512 = vmatmul.f32.gmra.mxu0 %v397
        %v513 = vpop.f32.mrf.mxu0
        %v514 = vadd.f32 %v393, %v513
        %515 = vmatmul.f32.gmra.mxu0 %v400
        %v516 = vpop.f32.mrf.mxu0
        %v517 = vadd.f32 %v393, %v516
        %518 = vmatmul.f32.gmra.mxu0 %v403
        %v519 = vpop.f32.mrf.mxu0
        %v520 = vadd.f32 %v393, %v519
        %521 = vmatmul.f32.gmra.mxu0 %v406
        %v522 = vpop.f32.mrf.mxu0
        %v523 = vadd.f32 %v393, %v522
        %524 = vmatmul.f32.gmra.mxu0 %v409
        %v525 = vpop.f32.mrf.mxu0
        %v526 = vadd.f32 %v393, %v525
        %527 = vmatmul.f32.gmra.mxu0 %v412
        %v528 = vpop.f32.mrf.mxu0
        %v529 = vadd.f32 %v393, %v528
        %530 = vmatmul.f32.gmra.mxu0 %v415
        %v531 = vpop.f32.mrf.mxu0
        %v532 = vadd.f32 %v393, %v531
        %533 = vmatmul.f32.gmra.mxu0 %v418
        %v534 = vpop.f32.mrf.mxu0
        %v535 = vadd.f32 %v393, %v534
        %536 = vmatmul.f32.gmra.mxu0 %v421
        %v537 = vpop.f32.mrf.mxu0
        %v538 = vadd.f32 %v393, %v537
        %539 = vmatmul.f32.gmra.mxu0 %v424
        %v540 = vpop.f32.mrf.mxu0
        %v541 = vadd.f32 %v393, %v540
        %542 = vmatmul.f32.gmra.mxu0 %v427
        %v543 = vpop.f32.mrf.mxu0
        %v544 = vadd.f32 %v393, %v543
        %545 = vmatmul.f32.gmra.mxu0 %v430
        %v546 = vpop.f32.mrf.mxu0
        %v547 = vadd.f32 %v393, %v546
        %548 = vmatmul.f32.gmra.mxu0 %v433
        %v549 = vpop.f32.mrf.mxu0
        %v550 = vadd.f32 %v393, %v549
        %551 = vmatmul.f32.gmra.mxu0 %v436
        %v552 = vpop.f32.mrf.mxu0
        %v553 = vadd.f32 %v393, %v552
        %554 = vmatmul.f32.gmra.mxu0 %v439
        %v555 = vpop.f32.mrf.mxu0
        %v556 = vadd.f32 %v393, %v555
        %557 = vmatmul.f32.gmra.mxu0 %v442
        %v558 = vpop.f32.mrf.mxu0
        %v559 = vadd.f32 %v393, %v558
        %560 = vmatmul.f32.gmra.mxu0 %v445
        %v561 = vpop.f32.mrf.mxu0
        %v562 = vadd.f32 %v393, %v561
        %563 = vmatmul.f32.gmra.mxu0 %v448
        %v564 = vpop.f32.mrf.mxu0
        %v565 = vadd.f32 %v393, %v564
        %566 = vmatmul.f32.gmra.mxu0 %v451
        %v567 = vpop.f32.mrf.mxu0
        %v568 = vadd.f32 %v393, %v567
        %569 = vmatmul.f32.gmra.mxu0 %v454
        %v570 = vpop.f32.mrf.mxu0
        %v571 = vadd.f32 %v393, %v570
        %572 = vmatmul.f32.gmra.mxu0 %v457
        %v573 = vpop.f32.mrf.mxu0
        %v574 = vadd.f32 %v393, %v573
        %575 = vmatmul.f32.gmra.mxu0 %v460
        %v576 = vpop.f32.mrf.mxu0
        %v577 = vadd.f32 %v393, %v576
        %578 = vmatmul.f32.gmra.mxu0 %v463
        %v579 = vpop.f32.mrf.mxu0
        %v580 = vadd.f32 %v393, %v579
        %581 = vmatmul.f32.gmra.mxu0 %v466
        %v582 = vpop.f32.mrf.mxu0
        %v583 = vadd.f32 %v393, %v582
        %584 = vmatmul.f32.gmra.mxu0 %v469
        %v585 = vpop.f32.mrf.mxu0
        %v586 = vadd.f32 %v393, %v585
        %587 = vmatmul.f32.gmra.mxu0 %v472
        %v588 = vpop.f32.mrf.mxu0
        %v589 = vadd.f32 %v393, %v588
        %590 = vmatmul.f32.gmra.mxu0 %v475
        %v591 = vpop.f32.mrf.mxu0
        %v592 = vadd.f32 %v393, %v591
        %593 = vmatmul.f32.gmra.mxu0 %v478
        %v594 = vpop.f32.mrf.mxu0
        %v595 = vadd.f32 %v393, %v594
        %596 = vmatmul.f32.gmra.mxu0 %v481
        %v597 = vpop.f32.mrf.mxu0
        %v598 = vadd.f32 %v393, %v597
        %599 = vmatmul.f32.gmra.mxu0 %v484
        %v600 = vpop.f32.mrf.mxu0
        %v601 = vadd.f32 %v393, %v600
        %602 = vmatmul.f32.gmra.mxu0 %v487
        %v603 = vpop.f32.mrf.mxu0
        %v604 = vadd.f32 %v393, %v603
        %605 = vmatmul.f32.gmra.mxu0 %v490
        %v606 = vpop.f32.mrf.mxu0
        %v607 = vadd.f32 %v393, %v606
        %608 = vdwg.mxu0
        %v609 = vmax.f32 %v514, 0.0
        %v610 = vmax.f32 %v517, 0.0
        %v611 = vmax.f32 %v520, 0.0
        %v612 = vmax.f32 %v523, 0.0
        %v613 = vmax.f32 %v526, 0.0
        %v614 = vmax.f32 %v529, 0.0
        %v615 = vmax.f32 %v532, 0.0
        %v616 = vmax.f32 %v535, 0.0
        %v617 = vmax.f32 %v538, 0.0
        %v618 = vmax.f32 %v541, 0.0
        %v619 = vmax.f32 %v544, 0.0
        %v620 = vmax.f32 %v547, 0.0
        %v621 = vmax.f32 %v550, 0.0
        %v622 = vmax.f32 %v553, 0.0
        %v623 = vmax.f32 %v556, 0.0
        %v624 = vmax.f32 %v559, 0.0
        %v625 = vmax.f32 %v562, 0.0
        %v626 = vmax.f32 %v565, 0.0
        %v627 = vmax.f32 %v568, 0.0
        %v628 = vmax.f32 %v571, 0.0
        %v629 = vmax.f32 %v574, 0.0
        %v630 = vmax.f32 %v577, 0.0
        %v631 = vmax.f32 %v580, 0.0
        %v632 = vmax.f32 %v583, 0.0
        %v633 = vmax.f32 %v586, 0.0
        %v634 = vmax.f32 %v589, 0.0
        %v635 = vmax.f32 %v592, 0.0
        %v636 = vmax.f32 %v595, 0.0
        %v637 = vmax.f32 %v598, 0.0
        %v638 = vmax.f32 %v601, 0.0
        %v639 = vmax.f32 %v604, 0.0
        %v640 = vmax.f32 %v607, 0.0
        %v641 = vld [vmem:[%s3] sm:$0xff]
        %v642 = vld [vmem:[%s3 + $0x8] sm:$0xff]
        %v643 = vld [vmem:[%s3 + $0x10] sm:$0xff]
        %v644 = vld [vmem:[%s4] sm:$0x1]
        %v646 = vperm.slane %v644, 0
        %vm648 = vcmask 195584
        %v650 = vsel %vm648, %v609, 0
        %v653 = vsel %vm648, %v610, 0
        %v656 = vsel %vm648, %v611, 0
        %v659 = vsel %vm648, %v612, 0
        %v662 = vsel %vm648, %v613, 0
        %v665 = vsel %vm648, %v614, 0
        %v668 = vsel %vm648, %v615, 0
        %v671 = vsel %vm648, %v616, 0
        %v674 = vsel %vm648, %v617, 0
        %v677 = vsel %vm648, %v618, 0
        %v680 = vsel %vm648, %v619, 0
        %v683 = vsel %vm648, %v620, 0
        %v686 = vsel %vm648, %v621, 0
        %v689 = vsel %vm648, %v622, 0
        %v692 = vsel %vm648, %v623, 0
        %v695 = vsel %vm648, %v624, 0
        %v698 = vsel %vm648, %v625, 0
        %v701 = vsel %vm648, %v626, 0
        %v704 = vsel %vm648, %v627, 0
        %v707 = vsel %vm648, %v628, 0
        %v710 = vsel %vm648, %v629, 0
        %v713 = vsel %vm648, %v630, 0
        %v716 = vsel %vm648, %v631, 0
        %v719 = vsel %vm648, %v632, 0
        %v722 = vsel %vm648, %v633, 0
        %v725 = vsel %vm648, %v634, 0
        %v728 = vsel %vm648, %v635, 0
        %v731 = vsel %vm648, %v636, 0
        %v734 = vsel %vm648, %v637, 0
        %v737 = vsel %vm648, %v638, 0
        %v740 = vsel %vm648, %v639, 0
        %v743 = vsel %vm648, %v640, 0
        %745 = vmatpush.msra.mxu0 0.0
        %746 = vmatpush.msra.mxu0 0.0
        %747 = vmatpush.msra.mxu0 0.0
        %748 = vmatpush.msra.mxu0 0.0
        %749 = vmatpush.msra.mxu0 0.0
        %750 = vmatpush.msra.mxu0 0.0
        %751 = vmatpush.msra.mxu0 0.0
        %752 = vmatpush.msra.mxu0 0.0
        %753 = vmatpush.msra.mxu0 0.0
        %754 = vmatpush.msra.mxu0 0.0
        %755 = vmatpush.msra.mxu0 0.0
        %756 = vmatpush.msra.mxu0 0.0
        %757 = vmatpush.msra.mxu0 0.0
        %758 = vmatpush.msra.mxu0 %v643
        %759 = vmatpush.msra.mxu0 %v642
        %760 = vmatpush.msra.mxu0 %v641
        %761 = vmatmul.f32.gmra.mxu0 %v650
        %v762 = vpop.f32.mrf.mxu0
        %v763 = vadd.f32 %v646, %v762
        %764 = vmatmul.f32.gmra.mxu0 %v653
        %v765 = vpop.f32.mrf.mxu0
        %v766 = vadd.f32 %v646, %v765
        %767 = vmatmul.f32.gmra.mxu0 %v656
        %v768 = vpop.f32.mrf.mxu0
        %v769 = vadd.f32 %v646, %v768
        %770 = vmatmul.f32.gmra.mxu0 %v659
        %v771 = vpop.f32.mrf.mxu0
        %v772 = vadd.f32 %v646, %v771
        %773 = vmatmul.f32.gmra.mxu0 %v662
        %v774 = vpop.f32.mrf.mxu0
        %v775 = vadd.f32 %v646, %v774
        %776 = vmatmul.f32.gmra.mxu0 %v665
        %v777 = vpop.f32.mrf.mxu0
        %v778 = vadd.f32 %v646, %v777
        %779 = vmatmul.f32.gmra.mxu0 %v668
        %v780 = vpop.f32.mrf.mxu0
        %v781 = vadd.f32 %v646, %v780
        %782 = vmatmul.f32.gmra.mxu0 %v671
        %v783 = vpop.f32.mrf.mxu0
        %v784 = vadd.f32 %v646, %v783
        %785 = vmatmul.f32.gmra.mxu0 %v674
        %v786 = vpop.f32.mrf.mxu0
        %v787 = vadd.f32 %v646, %v786
        %788 = vmatmul.f32.gmra.mxu0 %v677
        %v789 = vpop.f32.mrf.mxu0
        %v790 = vadd.f32 %v646, %v789
        %791 = vmatmul.f32.gmra.mxu0 %v680
        %v792 = vpop.f32.mrf.mxu0
        %v793 = vadd.f32 %v646, %v792
        %794 = vmatmul.f32.gmra.mxu0 %v683
        %v795 = vpop.f32.mrf.mxu0
        %v796 = vadd.f32 %v646, %v795
        %797 = vmatmul.f32.gmra.mxu0 %v686
        %v798 = vpop.f32.mrf.mxu0
        %v799 = vadd.f32 %v646, %v798
        %800 = vmatmul.f32.gmra.mxu0 %v689
        %v801 = vpop.f32.mrf.mxu0
        %v802 = vadd.f32 %v646, %v801
        %803 = vmatmul.f32.gmra.mxu0 %v692
        %v804 = vpop.f32.mrf.mxu0
        %v805 = vadd.f32 %v646, %v804
        %806 = vmatmul.f32.gmra.mxu0 %v695
        %v807 = vpop.f32.mrf.mxu0
        %v808 = vadd.f32 %v646, %v807
        %809 = vmatmul.f32.gmra.mxu0 %v698
        %v810 = vpop.f32.mrf.mxu0
        %v811 = vadd.f32 %v646, %v810
        %812 = vmatmul.f32.gmra.mxu0 %v701
        %v813 = vpop.f32.mrf.mxu0
        %v814 = vadd.f32 %v646, %v813
        %815 = vmatmul.f32.gmra.mxu0 %v704
        %v816 = vpop.f32.mrf.mxu0
        %v817 = vadd.f32 %v646, %v816
        %818 = vmatmul.f32.gmra.mxu0 %v707
        %v819 = vpop.f32.mrf.mxu0
        %v820 = vadd.f32 %v646, %v819
        %821 = vmatmul.f32.gmra.mxu0 %v710
        %v822 = vpop.f32.mrf.mxu0
        %v823 = vadd.f32 %v646, %v822
        %824 = vmatmul.f32.gmra.mxu0 %v713
        %v825 = vpop.f32.mrf.mxu0
        %v826 = vadd.f32 %v646, %v825
        %827 = vmatmul.f32.gmra.mxu0 %v716
        %v828 = vpop.f32.mrf.mxu0
        %v829 = vadd.f32 %v646, %v828
        %830 = vmatmul.f32.gmra.mxu0 %v719
        %v831 = vpop.f32.mrf.mxu0
        %v832 = vadd.f32 %v646, %v831
        %833 = vmatmul.f32.gmra.mxu0 %v722
        %v834 = vpop.f32.mrf.mxu0
        %v835 = vadd.f32 %v646, %v834
        %836 = vmatmul.f32.gmra.mxu0 %v725
        %v837 = vpop.f32.mrf.mxu0
        %v838 = vadd.f32 %v646, %v837
        %839 = vmatmul.f32.gmra.mxu0 %v728
        %v840 = vpop.f32.mrf.mxu0
        %v841 = vadd.f32 %v646, %v840
        %842 = vmatmul.f32.gmra.mxu0 %v731
        %v843 = vpop.f32.mrf.mxu0
        %v844 = vadd.f32 %v646, %v843
        %845 = vmatmul.f32.gmra.mxu0 %v734
        %v846 = vpop.f32.mrf.mxu0
        %v847 = vadd.f32 %v646, %v846
        %848 = vmatmul.f32.gmra.mxu0 %v737
        %v849 = vpop.f32.mrf.mxu0
        %v850 = vadd.f32 %v646, %v849
        %851 = vmatmul.f32.gmra.mxu0 %v740
        %v852 = vpop.f32.mrf.mxu0
        %v853 = vadd.f32 %v646, %v852
        %854 = vmatmul.f32.gmra.mxu0 %v743
        %v855 = vpop.f32.mrf.mxu0
        %v856 = vadd.f32 %v646, %v855
        %857 = vdwg.mxu0
        %v858 = vtanh.pop %v763
        %v859 = vtanh.pop %v766
        %v860 = vtanh.pop %v769
        %v861 = vtanh.pop %v772
        %v862 = vtanh.pop %v775
        %v863 = vtanh.pop %v778
        %v864 = vtanh.pop %v781
        %v865 = vtanh.pop %v784
        %v866 = vtanh.pop %v787
        %v867 = vtanh.pop %v790
        %v868 = vtanh.pop %v793
        %v869 = vtanh.pop %v796
        %v870 = vtanh.pop %v799
        %v871 = vtanh.pop %v802
        %v872 = vtanh.pop %v805
        %v873 = vtanh.pop %v808
        %v874 = vtanh.pop %v811
        %v875 = vtanh.pop %v814
        %v876 = vtanh.pop %v817
        %v877 = vtanh.pop %v820
        %v878 = vtanh.pop %v823
        %v879 = vtanh.pop %v826
        %v880 = vtanh.pop %v829
        %v881 = vtanh.pop %v832
        %v882 = vtanh.pop %v835
        %v883 = vtanh.pop %v838
        %v884 = vtanh.pop %v841
        %v885 = vtanh.pop %v844
        %v886 = vtanh.pop %v847
        %v887 = vtanh.pop %v850
        %v888 = vtanh.pop %v853
        %v889 = vtanh.pop %v856
        %v890 = vld [vmem:[%s5] sm:$0xff]
        %v891 = vld [vmem:[%s5 + $0x8] sm:$0xff]
        %v892 = vld [vmem:[%s6] sm:$0x1]
        %v894 = vperm.slane %v892, 0
        %vm896 = vcmask 130048
        %v898 = vsel %vm896, %v858, 0
        %v901 = vsel %vm896, %v859, 0
        %v904 = vsel %vm896, %v860, 0
        %v907 = vsel %vm896, %v861, 0
        %v910 = vsel %vm896, %v862, 0
        %v913 = vsel %vm896, %v863, 0
        %v916 = vsel %vm896, %v864, 0
        %v919 = vsel %vm896, %v865, 0
        %v922 = vsel %vm896, %v866, 0
        %v925 = vsel %vm896, %v867, 0
        %v928 = vsel %vm896, %v868, 0
        %v931 = vsel %vm896, %v869, 0
        %v934 = vsel %vm896, %v870, 0
        %v937 = vsel %vm896, %v871, 0
        %v940 = vsel %vm896, %v872, 0
        %v943 = vsel %vm896, %v873, 0
        %v946 = vsel %vm896, %v874, 0
        %v949 = vsel %vm896, %v875, 0
        %v952 = vsel %vm896, %v876, 0
        %v955 = vsel %vm896, %v877, 0
        %v958 = vsel %vm896, %v878, 0
        %v961 = vsel %vm896, %v879, 0
        %v964 = vsel %vm896, %v880, 0
        %v967 = vsel %vm896, %v881, 0
        %v970 = vsel %vm896, %v882, 0
        %v973 = vsel %vm896, %v883, 0
        %v976 = vsel %vm896, %v884, 0
        %v979 = vsel %vm896, %v885, 0
        %v982 = vsel %vm896, %v886, 0
        %v985 = vsel %vm896, %v887, 0
        %v988 = vsel %vm896, %v888, 0
        %v991 = vsel %vm896, %v889, 0
        %993 = vmatpush.msra.mxu0 0.0
        %994 = vmatpush.msra.mxu0 0.0
        %995 = vmatpush.msra.mxu0 0.0
        %996 = vmatpush.msra.mxu0 0.0
        %997 = vmatpush.msra.mxu0 0.0
        %998 = vmatpush.msra.mxu0 0.0
        %999 = vmatpush.msra.mxu0 0.0
        %1000 = vmatpush.msra.mxu0 0.0
        %1001 = vmatpush.msra.mxu0 0.0
        %1002 = vmatpush.msra.mxu0 0.0
        %1003 = vmatpush.msra.mxu0 0.0
        %1004 = vmatpush.msra.mxu0 0.0
        %1005 = vmatpush.msra.mxu0 0.0
        %1006 = vmatpush.msra.mxu0 0.0
        %1007 = vmatpush.msra.mxu0 %v891
        %1008 = vmatpush.msra.mxu0 %v890
        %1009 = vmatmul.f32.gmra.mxu0 %v898
        %v1010 = vpop.f32.mrf.mxu0
        %v1011 = vadd.f32 %v894, %v1010
        %1012 = vmatmul.f32.gmra.mxu0 %v901
        %v1013 = vpop.f32.mrf.mxu0
        %v1014 = vadd.f32 %v894, %v1013
        %1015 = vmatmul.f32.gmra.mxu0 %v904
        %v1016 = vpop.f32.mrf.mxu0
        %v1017 = vadd.f32 %v894, %v1016
        %1018 = vmatmul.f32.gmra.mxu0 %v907
        %v1019 = vpop.f32.mrf.mxu0
        %v1020 = vadd.f32 %v894, %v1019
        %1021 = vmatmul.f32.gmra.mxu0 %v910
        %v1022 = vpop.f32.mrf.mxu0
        %v1023 = vadd.f32 %v894, %v1022
        %1024 = vmatmul.f32.gmra.mxu0 %v913
        %v1025 = vpop.f32.mrf.mxu0
        %v1026 = vadd.f32 %v894, %v1025
        %1027 = vmatmul.f32.gmra.mxu0 %v916
        %v1028 = vpop.f32.mrf.mxu0
        %v1029 = vadd.f32 %v894, %v1028
        %1030 = vmatmul.f32.gmra.mxu0 %v919
        %v1031 = vpop.f32.mrf.mxu0
        %v1032 = vadd.f32 %v894, %v1031
        %1033 = vmatmul.f32.gmra.mxu0 %v922
        %v1034 = vpop.f32.mrf.mxu0
        %v1035 = vadd.f32 %v894, %v1034
        %1036 = vmatmul.f32.gmra.mxu0 %v925
        %v1037 = vpop.f32.mrf.mxu0
        %v1038 = vadd.f32 %v894, %v1037
        %1039 = vmatmul.f32.gmra.mxu0 %v928
        %v1040 = vpop.f32.mrf.mxu0
        %v1041 = vadd.f32 %v894, %v1040
        %1042 = vmatmul.f32.gmra.mxu0 %v931
        %v1043 = vpop.f32.mrf.mxu0
        %v1044 = vadd.f32 %v894, %v1043
        %1045 = vmatmul.f32.gmra.mxu0 %v934
        %v1046 = vpop.f32.mrf.mxu0
        %v1047 = vadd.f32 %v894, %v1046
        %1048 = vmatmul.f32.gmra.mxu0 %v937
        %v1049 = vpop.f32.mrf.mxu0
        %v1050 = vadd.f32 %v894, %v1049
        %1051 = vmatmul.f32.gmra.mxu0 %v940
        %v1052 = vpop.f32.mrf.mxu0
        %v1053 = vadd.f32 %v894, %v1052
        %1054 = vmatmul.f32.gmra.mxu0 %v943
        %v1055 = vpop.f32.mrf.mxu0
        %v1056 = vadd.f32 %v894, %v1055
        %1057 = vmatmul.f32.gmra.mxu0 %v946
        %v1058 = vpop.f32.mrf.mxu0
        %v1059 = vadd.f32 %v894, %v1058
        %1060 = vmatmul.f32.gmra.mxu0 %v949
        %v1061 = vpop.f32.mrf.mxu0
        %v1062 = vadd.f32 %v894, %v1061
        %1063 = vmatmul.f32.gmra.mxu0 %v952
        %v1064 = vpop.f32.mrf.mxu0
        %v1065 = vadd.f32 %v894, %v1064
        %1066 = vmatmul.f32.gmra.mxu0 %v955
        %v1067 = vpop.f32.mrf.mxu0
        %v1068 = vadd.f32 %v894, %v1067
        %1069 = vmatmul.f32.gmra.mxu0 %v958
        %v1070 = vpop.f32.mrf.mxu0
        %v1071 = vadd.f32 %v894, %v1070
        %1072 = vmatmul.f32.gmra.mxu0 %v961
        %v1073 = vpop.f32.mrf.mxu0
        %v1074 = vadd.f32 %v894, %v1073
        %1075 = vmatmul.f32.gmra.mxu0 %v964
        %v1076 = vpop.f32.mrf.mxu0
        %v1077 = vadd.f32 %v894, %v1076
        %1078 = vmatmul.f32.gmra.mxu0 %v967
        %v1079 = vpop.f32.mrf.mxu0
        %v1080 = vadd.f32 %v894, %v1079
        %1081 = vmatmul.f32.gmra.mxu0 %v970
        %v1082 = vpop.f32.mrf.mxu0
        %v1083 = vadd.f32 %v894, %v1082
        %1084 = vmatmul.f32.gmra.mxu0 %v973
        %v1085 = vpop.f32.mrf.mxu0
        %v1086 = vadd.f32 %v894, %v1085
        %1087 = vmatmul.f32.gmra.mxu0 %v976
        %v1088 = vpop.f32.mrf.mxu0
        %v1089 = vadd.f32 %v894, %v1088
        %1090 = vmatmul.f32.gmra.mxu0 %v979
        %v1091 = vpop.f32.mrf.mxu0
        %v1092 = vadd.f32 %v894, %v1091
        %1093 = vmatmul.f32.gmra.mxu0 %v982
        %v1094 = vpop.f32.mrf.mxu0
        %v1095 = vadd.f32 %v894, %v1094
        %1096 = vmatmul.f32.gmra.mxu0 %v985
        %v1097 = vpop.f32.mrf.mxu0
        %v1098 = vadd.f32 %v894, %v1097
        %1099 = vmatmul.f32.gmra.mxu0 %v988
        %v1100 = vpop.f32.mrf.mxu0
        %v1101 = vadd.f32 %v894, %v1100
        %1102 = vmatmul.f32.gmra.mxu0 %v991
        %v1103 = vpop.f32.mrf.mxu0
        %v1104 = vadd.f32 %v894, %v1103
        %1105 = vdwg.mxu0
        %v1106 = vmax.f32 %v1011, 0.0
        %v1107 = vmax.f32 %v1014, 0.0
        %v1108 = vmax.f32 %v1017, 0.0
        %v1109 = vmax.f32 %v1020, 0.0
        %v1110 = vmax.f32 %v1023, 0.0
        %v1111 = vmax.f32 %v1026, 0.0
        %v1112 = vmax.f32 %v1029, 0.0
        %v1113 = vmax.f32 %v1032, 0.0
        %v1114 = vmax.f32 %v1035, 0.0
        %v1115 = vmax.f32 %v1038, 0.0
        %v1116 = vmax.f32 %v1041, 0.0
        %v1117 = vmax.f32 %v1044, 0.0
        %v1118 = vmax.f32 %v1047, 0.0
        %v1119 = vmax.f32 %v1050, 0.0
        %v1120 = vmax.f32 %v1053, 0.0
        %v1121 = vmax.f32 %v1056, 0.0
        %v1122 = vmax.f32 %v1059, 0.0
        %v1123 = vmax.f32 %v1062, 0.0
        %v1124 = vmax.f32 %v1065, 0.0
        %v1125 = vmax.f32 %v1068, 0.0
        %v1126 = vmax.f32 %v1071, 0.0
        %v1127 = vmax.f32 %v1074, 0.0
        %v1128 = vmax.f32 %v1077, 0.0
        %v1129 = vmax.f32 %v1080, 0.0
        %v1130 = vmax.f32 %v1083, 0.0
        %v1131 = vmax.f32 %v1086, 0.0
        %v1132 = vmax.f32 %v1089, 0.0
        %v1133 = vmax.f32 %v1092, 0.0
        %v1134 = vmax.f32 %v1095, 0.0
        %v1135 = vmax.f32 %v1098, 0.0
        %v1136 = vmax.f32 %v1101, 0.0
        %v1137 = vmax.f32 %v1104, 0.0
        %v1138 = vld [vmem:[%s7] sm:$0xff]
        %v1139 = vld [vmem:[%s7 + $0x8] sm:$0xff]
        %v1140 = vld [vmem:[%s7 + $0x10] sm:$0xff]
        %v1141 = vld [vmem:[%s8] sm:$0x1]
        %v1143 = vperm.slane %v1141, 0
        %v1146 = vsel %vm648, %v1106, 0
        %v1149 = vsel %vm648, %v1107, 0
        %v1152 = vsel %vm648, %v1108, 0
        %v1155 = vsel %vm648, %v1109, 0
        %v1158 = vsel %vm648, %v1110, 0
        %v1161 = vsel %vm648, %v1111, 0
        %v1164 = vsel %vm648, %v1112, 0
        %v1167 = vsel %vm648, %v1113, 0
        %v1170 = vsel %vm648, %v1114, 0
        %v1173 = vsel %vm648, %v1115, 0
        %v1176 = vsel %vm648, %v1116, 0
        %v1179 = vsel %vm648, %v1117, 0
        %v1182 = vsel %vm648, %v1118, 0
        %v1185 = vsel %vm648, %v1119, 0
        %v1188 = vsel %vm648, %v1120, 0
        %v1191 = vsel %vm648, %v1121, 0
        %v1194 = vsel %vm648, %v1122, 0
        %v1197 = vsel %vm648, %v1123, 0
        %v1200 = vsel %vm648, %v1124, 0
        %v1203 = vsel %vm648, %v1125, 0
        %v1206 = vsel %vm648, %v1126, 0
        %v1209 = vsel %vm648, %v1127, 0
        %v1212 = vsel %vm648, %v1128, 0
        %v1215 = vsel %vm648, %v1129, 0
        %v1218 = vsel %vm648, %v1130, 0
        %v1221 = vsel %vm648, %v1131, 0
        %v1224 = vsel %vm648, %v1132, 0
        %v1227 = vsel %vm648, %v1133, 0
        %v1230 = vsel %vm648, %v1134, 0
        %v1233 = vsel %vm648, %v1135, 0
        %v1236 = vsel %vm648, %v1136, 0
        %v1239 = vsel %vm648, %v1137, 0
        %1241 = vmatpush.msra.mxu0 0.0
        %1242 = vmatpush.msra.mxu0 0.0
        %1243 = vmatpush.msra.mxu0 0.0
        %1244 = vmatpush.msra.mxu0 0.0
        %1245 = vmatpush.msra.mxu0 0.0
        %1246 = vmatpush.msra.mxu0 0.0
        %1247 = vmatpush.msra.mxu0 0.0
        %1248 = vmatpush.msra.mxu0 0.0
        %1249 = vmatpush.msra.mxu0 0.0
        %1250 = vmatpush.msra.mxu0 0.0
        %1251 = vmatpush.msra.mxu0 0.0
        %1252 = vmatpush.msra.mxu0 0.0
        %1253 = vmatpush.msra.mxu0 0.0
        %1254 = vmatpush.msra.mxu0 %v1140
        %1255 = vmatpush.msra.mxu0 %v1139
        %1256 = vmatpush.msra.mxu0 %v1138
        %1257 = vmatmul.f32.gmra.mxu0 %v1146
        %v1258 = vpop.f32.mrf.mxu0
        %v1259 = vadd.f32 %v1143, %v1258
        %1260 = vmatmul.f32.gmra.mxu0 %v1149
        %v1261 = vpop.f32.mrf.mxu0
        %v1262 = vadd.f32 %v1143, %v1261
        %1263 = vmatmul.f32.gmra.mxu0 %v1152
        %v1264 = vpop.f32.mrf.mxu0
        %v1265 = vadd.f32 %v1143, %v1264
        %1266 = vmatmul.f32.gmra.mxu0 %v1155
        %v1267 = vpop.f32.mrf.mxu0
        %v1268 = vadd.f32 %v1143, %v1267
        %1269 = vmatmul.f32.gmra.mxu0 %v1158
        %v1270 = vpop.f32.mrf.mxu0
        %v1271 = vadd.f32 %v1143, %v1270
        %1272 = vmatmul.f32.gmra.mxu0 %v1161
        %v1273 = vpop.f32.mrf.mxu0
        %v1274 = vadd.f32 %v1143, %v1273
        %1275 = vmatmul.f32.gmra.mxu0 %v1164
        %v1276 = vpop.f32.mrf.mxu0
        %v1277 = vadd.f32 %v1143, %v1276
        %1278 = vmatmul.f32.gmra.mxu0 %v1167
        %v1279 = vpop.f32.mrf.mxu0
        %v1280 = vadd.f32 %v1143, %v1279
        %1281 = vmatmul.f32.gmra.mxu0 %v1170
        %v1282 = vpop.f32.mrf.mxu0
        %v1283 = vadd.f32 %v1143, %v1282
        %1284 = vmatmul.f32.gmra.mxu0 %v1173
        %v1285 = vpop.f32.mrf.mxu0
        %v1286 = vadd.f32 %v1143, %v1285
        %1287 = vmatmul.f32.gmra.mxu0 %v1176
        %v1288 = vpop.f32.mrf.mxu0
        %v1289 = vadd.f32 %v1143, %v1288
        %1290 = vmatmul.f32.gmra.mxu0 %v1179
        %v1291 = vpop.f32.mrf.mxu0
        %v1292 = vadd.f32 %v1143, %v1291
        %1293 = vmatmul.f32.gmra.mxu0 %v1182
        %v1294 = vpop.f32.mrf.mxu0
        %v1295 = vadd.f32 %v1143, %v1294
        %1296 = vmatmul.f32.gmra.mxu0 %v1185
        %v1297 = vpop.f32.mrf.mxu0
        %v1298 = vadd.f32 %v1143, %v1297
        %1299 = vmatmul.f32.gmra.mxu0 %v1188
        %v1300 = vpop.f32.mrf.mxu0
        %v1301 = vadd.f32 %v1143, %v1300
        %1302 = vmatmul.f32.gmra.mxu0 %v1191
        %v1303 = vpop.f32.mrf.mxu0
        %v1304 = vadd.f32 %v1143, %v1303
        %1305 = vmatmul.f32.gmra.mxu0 %v1194
        %v1306 = vpop.f32.mrf.mxu0
        %v1307 = vadd.f32 %v1143, %v1306
        %1308 = vmatmul.f32.gmra.mxu0 %v1197
        %v1309 = vpop.f32.mrf.mxu0
        %v1310 = vadd.f32 %v1143, %v1309
        %1311 = vmatmul.f32.gmra.mxu0 %v1200
        %v1312 = vpop.f32.mrf.mxu0
        %v1313 = vadd.f32 %v1143, %v1312
        %1314 = vmatmul.f32.gmra.mxu0 %v1203
        %v1315 = vpop.f32.mrf.mxu0
        %v1316 = vadd.f32 %v1143, %v1315
        %1317 = vmatmul.f32.gmra.mxu0 %v1206
        %v1318 = vpop.f32.mrf.mxu0
        %v1319 = vadd.f32 %v1143, %v1318
        %1320 = vmatmul.f32.gmra.mxu0 %v1209
        %v1321 = vpop.f32.mrf.mxu0
        %v1322 = vadd.f32 %v1143, %v1321
        %1323 = vmatmul.f32.gmra.mxu0 %v1212
        %v1324 = vpop.f32.mrf.mxu0
        %v1325 = vadd.f32 %v1143, %v1324
        %1326 = vmatmul.f32.gmra.mxu0 %v1215
        %v1327 = vpop.f32.mrf.mxu0
        %v1328 = vadd.f32 %v1143, %v1327
        %1329 = vmatmul.f32.gmra.mxu0 %v1218
        %v1330 = vpop.f32.mrf.mxu0
        %v1331 = vadd.f32 %v1143, %v1330
        %1332 = vmatmul.f32.gmra.mxu0 %v1221
        %v1333 = vpop.f32.mrf.mxu0
        %v1334 = vadd.f32 %v1143, %v1333
        %1335 = vmatmul.f32.gmra.mxu0 %v1224
        %v1336 = vpop.f32.mrf.mxu0
        %v1337 = vadd.f32 %v1143, %v1336
        %1338 = vmatmul.f32.gmra.mxu0 %v1227
        %v1339 = vpop.f32.mrf.mxu0
        %v1340 = vadd.f32 %v1143, %v1339
        %1341 = vmatmul.f32.gmra.mxu0 %v1230
        %v1342 = vpop.f32.mrf.mxu0
        %v1343 = vadd.f32 %v1143, %v1342
        %1344 = vmatmul.f32.gmra.mxu0 %v1233
        %v1345 = vpop.f32.mrf.mxu0
        %v1346 = vadd.f32 %v1143, %v1345
        %1347 = vmatmul.f32.gmra.mxu0 %v1236
        %v1348 = vpop.f32.mrf.mxu0
        %v1349 = vadd.f32 %v1143, %v1348
        %1350 = vmatmul.f32.gmra.mxu0 %v1239
        %v1351 = vpop.f32.mrf.mxu0
        %v1352 = vadd.f32 %v1143, %v1351
        %1353 = vdwg.mxu0
        %v1354 = vtanh.pop %v1259
        %v1355 = vtanh.pop %v1262
        %v1356 = vtanh.pop %v1265
        %v1357 = vtanh.pop %v1268
        %v1358 = vtanh.pop %v1271
        %v1359 = vtanh.pop %v1274
        %v1360 = vtanh.pop %v1277
        %v1361 = vtanh.pop %v1280
        %v1362 = vtanh.pop %v1283
        %v1363 = vtanh.pop %v1286
        %v1364 = vtanh.pop %v1289
        %v1365 = vtanh.pop %v1292
        %v1366 = vtanh.pop %v1295
        %v1367 = vtanh.pop %v1298
        %v1368 = vtanh.pop %v1301
        %v1369 = vtanh.pop %v1304
        %v1370 = vtanh.pop %v1307
        %v1371 = vtanh.pop %v1310
        %v1372 = vtanh.pop %v1313
        %v1373 = vtanh.pop %v1316
        %v1374 = vtanh.pop %v1319
        %v1375 = vtanh.pop %v1322
        %v1376 = vtanh.pop %v1325
        %v1377 = vtanh.pop %v1328
        %v1378 = vtanh.pop %v1331
        %v1379 = vtanh.pop %v1334
        %v1380 = vtanh.pop %v1337
        %v1381 = vtanh.pop %v1340
        %v1382 = vtanh.pop %v1343
        %v1383 = vtanh.pop %v1346
        %v1384 = vtanh.pop %v1349
        %v1385 = vtanh.pop %v1352
        %1386 = vst.msk [vmem:[%s334] sm:$0xff] %vm395, %v1354
        %1387 = vst.msk [vmem:[%s334 + $0x8] sm:$0xff] %vm395, %v1355
        %1388 = vst.msk [vmem:[%s334 + $0x10] sm:$0xff] %vm395, %v1356
        %1389 = vst.msk [vmem:[%s334 + $0x18] sm:$0xff] %vm395, %v1357
        %1390 = vst.msk [vmem:[%s334 + $0x20] sm:$0xff] %vm395, %v1358
        %1391 = vst.msk [vmem:[%s334 + $0x28] sm:$0xff] %vm395, %v1359
        %1392 = vst.msk [vmem:[%s334 + $0x30] sm:$0xff] %vm395, %v1360
        %1393 = vst.msk [vmem:[%s334 + $0x38] sm:$0xff] %vm395, %v1361
        %1394 = vst.msk [vmem:[%s334 + $0x40] sm:$0xff] %vm395, %v1362
        %1395 = vst.msk [vmem:[%s334 + $0x48] sm:$0xff] %vm395, %v1363
        %1396 = vst.msk [vmem:[%s334 + $0x50] sm:$0xff] %vm395, %v1364
        %1397 = vst.msk [vmem:[%s334 + $0x58] sm:$0xff] %vm395, %v1365
        %1398 = vst.msk [vmem:[%s334 + $0x60] sm:$0xff] %vm395, %v1366
        %1399 = vst.msk [vmem:[%s334 + $0x68] sm:$0xff] %vm395, %v1367
        %1400 = vst.msk [vmem:[%s334 + $0x70] sm:$0xff] %vm395, %v1368
        %1401 = vst.msk [vmem:[%s334 + $0x78] sm:$0xff] %vm395, %v1369
        %1402 = vst.msk [vmem:[%s334 + $0x80] sm:$0xff] %vm395, %v1370
        %1403 = vst.msk [vmem:[%s334 + $0x88] sm:$0xff] %vm395, %v1371
        %1404 = vst.msk [vmem:[%s334 + $0x90] sm:$0xff] %vm395, %v1372
        %1405 = vst.msk [vmem:[%s334 + $0x98] sm:$0xff] %vm395, %v1373
        %1406 = vst.msk [vmem:[%s334 + $0xa0] sm:$0xff] %vm395, %v1374
        %1407 = vst.msk [vmem:[%s334 + $0xa8] sm:$0xff] %vm395, %v1375
        %1408 = vst.msk [vmem:[%s334 + $0xb0] sm:$0xff] %vm395, %v1376
        %1409 = vst.msk [vmem:[%s334 + $0xb8] sm:$0xff] %vm395, %v1377
        %1410 = vst.msk [vmem:[%s334 + $0xc0] sm:$0xff] %vm395, %v1378
        %1411 = vst.msk [vmem:[%s334 + $0xc8] sm:$0xff] %vm395, %v1379
        %1412 = vst.msk [vmem:[%s334 + $0xd0] sm:$0xff] %vm395, %v1380
        %1413 = vst.msk [vmem:[%s334 + $0xd8] sm:$0xff] %vm395, %v1381
        %1414 = vst.msk [vmem:[%s334 + $0xe0] sm:$0xff] %vm395, %v1382
        %1415 = vst.msk [vmem:[%s334 + $0xe8] sm:$0xff] %vm395, %v1383
        %1416 = vst.msk [vmem:[%s334 + $0xf0] sm:$0xff] %vm395, %v1384
        %1417 = vst.msk [vmem:[%s334 + $0xf8] sm:$0xff] %vm395, %v1385
        %s1418 = sand.u32 %s222, 1
        %s1419 = sand.u32 %s222, 1
        %s1420 = smul.addr %s1419, 256
        %s1421 = scalar_lea.vmem [#allocation2], %s1420
        // Predicated region
        $region57: #{autoencoder_forward.1} parent=55 // pred_check
          %p1422 = pneg %p232
        $region58: #{autoencoder_forward.1} parent=55 // pred_check_branch
          %1424 = sbr.rel (%p1422) target = $region60
        $region59: #{autoencoder_forward.1} parent=55 // pred_region
          %s1425 = smul.u32 32, %s20
          %s1426 = ssub.s32 38, %s1425
          %p1427 = scmp.lt.s32.totalorder %s1426, 32
          %s1428 = scalar_select %p1427, %s1426, 32
          %s1429 = smul.u32 8, %s1428
          %p1430 = scmp.ne.s32.totalorder 0, %s1429
          %s1431 = smul.addr %s1425, 8
          %s1432 = scalar_lea.vmem %s9, %s1431
          // Predicated region
          $region61: #{autoencoder_forward.1} parent=59 // pred_check
            %p1433 = pneg %p1430
          $region62: #{autoencoder_forward.1} parent=59 // pred_check_branch
            %1435 = sbr.rel (%p1433) target = $region64
          $region63: #{autoencoder_forward.1} parent=59 // pred_region
            // Predicated region
            $region65: #{autoencoder_forward.1} parent=63 // pred_check
              _
            $region66: #{autoencoder_forward.1} parent=63 // pred_check_branch
              %1437 = sbr.rel (0) target = $region68
            $region67: #{autoencoder_forward.1} parent=63 // pred_region
              // Predicated region
              $region87: #{autoencoder_forward.1} parent=67 // pred_check
                _
              $region88: #{autoencoder_forward.1} parent=67 // pred_check_branch
                %1549 = sbr.rel (0) target = $region90
              $region89: #{autoencoder_forward.1} parent=67 // pred_region
                %s1550 = sshrl.u32 %s1428, 5
                // While loop
                $region91: #{autoencoder_forward.1} parent=89 // loop_pre_header
                  _
                $region92: #{autoencoder_forward.1} parent=89 // loop_header
                  %s1552 = sphi 0, %s1554
                  %p1553 = scmp.ge.s32.totalorder %s1552, %s1550
                  %s1557 = sphi 0, %s1626
                  %s1558 = sphi %s1421, %s1629
                  %s1559 = sphi %s1432, %s1630
                $region93: #{autoencoder_forward.1} parent=89 // loop_header_branch
                  %1556 = sbr.rel (%p1553) target = $region97
                $region94: #{autoencoder_forward.1} parent=89 // loop_body
                  %v1560 = vld [vmem:[%s1558] sm:$0xff]
                  %1561 = vst [vmem:[%s1559] sm:$0xff] %v1560
                  %v1562 = vld [vmem:[%s1558 + $0x8] sm:$0xff]
                  %1563 = vst [vmem:[%s1559 + $0x8] sm:$0xff] %v1562
                  %v1564 = vld [vmem:[%s1558 + $0x10] sm:$0xff]
                  %1565 = vst [vmem:[%s1559 + $0x10] sm:$0xff] %v1564
                  %v1566 = vld [vmem:[%s1558 + $0x18] sm:$0xff]
                  %1567 = vst [vmem:[%s1559 + $0x18] sm:$0xff] %v1566
                  %v1568 = vld [vmem:[%s1558 + $0x20] sm:$0xff]
                  %1569 = vst [vmem:[%s1559 + $0x20] sm:$0xff] %v1568
                  %v1570 = vld [vmem:[%s1558 + $0x28] sm:$0xff]
                  %1571 = vst [vmem:[%s1559 + $0x28] sm:$0xff] %v1570
                  %v1572 = vld [vmem:[%s1558 + $0x30] sm:$0xff]
                  %1573 = vst [vmem:[%s1559 + $0x30] sm:$0xff] %v1572
                  %v1574 = vld [vmem:[%s1558 + $0x38] sm:$0xff]
                  %1575 = vst [vmem:[%s1559 + $0x38] sm:$0xff] %v1574
                  %v1576 = vld [vmem:[%s1558 + $0x40] sm:$0xff]
                  %1577 = vst [vmem:[%s1559 + $0x40] sm:$0xff] %v1576
                  %v1578 = vld [vmem:[%s1558 + $0x48] sm:$0xff]
                  %1579 = vst [vmem:[%s1559 + $0x48] sm:$0xff] %v1578
                  %v1580 = vld [vmem:[%s1558 + $0x50] sm:$0xff]
                  %1581 = vst [vmem:[%s1559 + $0x50] sm:$0xff] %v1580
                  %v1582 = vld [vmem:[%s1558 + $0x58] sm:$0xff]
                  %1583 = vst [vmem:[%s1559 + $0x58] sm:$0xff] %v1582
                  %v1584 = vld [vmem:[%s1558 + $0x60] sm:$0xff]
                  %1585 = vst [vmem:[%s1559 + $0x60] sm:$0xff] %v1584
                  %v1586 = vld [vmem:[%s1558 + $0x68] sm:$0xff]
                  %1587 = vst [vmem:[%s1559 + $0x68] sm:$0xff] %v1586
                  %v1588 = vld [vmem:[%s1558 + $0x70] sm:$0xff]
                  %1589 = vst [vmem:[%s1559 + $0x70] sm:$0xff] %v1588
                  %v1590 = vld [vmem:[%s1558 + $0x78] sm:$0xff]
                  %1591 = vst [vmem:[%s1559 + $0x78] sm:$0xff] %v1590
                  %v1592 = vld [vmem:[%s1558 + $0x80] sm:$0xff]
                  %1593 = vst [vmem:[%s1559 + $0x80] sm:$0xff] %v1592
                  %v1594 = vld [vmem:[%s1558 + $0x88] sm:$0xff]
                  %1595 = vst [vmem:[%s1559 + $0x88] sm:$0xff] %v1594
                  %v1596 = vld [vmem:[%s1558 + $0x90] sm:$0xff]
                  %1597 = vst [vmem:[%s1559 + $0x90] sm:$0xff] %v1596
                  %v1598 = vld [vmem:[%s1558 + $0x98] sm:$0xff]
                  %1599 = vst [vmem:[%s1559 + $0x98] sm:$0xff] %v1598
                  %v1600 = vld [vmem:[%s1558 + $0xa0] sm:$0xff]
                  %1601 = vst [vmem:[%s1559 + $0xa0] sm:$0xff] %v1600
                  %v1602 = vld [vmem:[%s1558 + $0xa8] sm:$0xff]
                  %1603 = vst [vmem:[%s1559 + $0xa8] sm:$0xff] %v1602
                  %v1604 = vld [vmem:[%s1558 + $0xb0] sm:$0xff]
                  %1605 = vst [vmem:[%s1559 + $0xb0] sm:$0xff] %v1604
                  %v1606 = vld [vmem:[%s1558 + $0xb8] sm:$0xff]
                  %1607 = vst [vmem:[%s1559 + $0xb8] sm:$0xff] %v1606
                  %v1608 = vld [vmem:[%s1558 + $0xc0] sm:$0xff]
                  %1609 = vst [vmem:[%s1559 + $0xc0] sm:$0xff] %v1608
                  %v1610 = vld [vmem:[%s1558 + $0xc8] sm:$0xff]
                  %1611 = vst [vmem:[%s1559 + $0xc8] sm:$0xff] %v1610
                  %v1612 = vld [vmem:[%s1558 + $0xd0] sm:$0xff]
                  %1613 = vst [vmem:[%s1559 + $0xd0] sm:$0xff] %v1612
                  %v1614 = vld [vmem:[%s1558 + $0xd8] sm:$0xff]
                  %1615 = vst [vmem:[%s1559 + $0xd8] sm:$0xff] %v1614
                  %v1616 = vld [vmem:[%s1558 + $0xe0] sm:$0xff]
                  %1617 = vst [vmem:[%s1559 + $0xe0] sm:$0xff] %v1616
                  %v1618 = vld [vmem:[%s1558 + $0xe8] sm:$0xff]
                  %1619 = vst [vmem:[%s1559 + $0xe8] sm:$0xff] %v1618
                  %v1620 = vld [vmem:[%s1558 + $0xf0] sm:$0xff]
                  %1621 = vst [vmem:[%s1559 + $0xf0] sm:$0xff] %v1620
                  %v1622 = vld [vmem:[%s1558 + $0xf8] sm:$0xff]
                  %1623 = vst [vmem:[%s1559 + $0xf8] sm:$0xff] %v1622
                  %s1624 = sadd.s32 1, %s1557
                  %p1625 = scmp.ge.s32.totalorder %s1624, %s1550
                  %s1626 = scalar_select %p1625, 0, %s1624
                  %s1627 = smul.u32 %s1626, 256
                  %s1628 = smul.u32 %s1626, 256
                  %s1629 = scalar_lea.vmem %s1421, %s1627 [#allocation2]
                  %s1630 = scalar_lea.vmem %s1432, %s1628
                $region95: #{autoencoder_forward.1} parent=89 // loop_footer
                  %s1554 = sadd.s32 %s1552, 1
                $region96: #{autoencoder_forward.1} parent=89 // loop_footer_branch
                  %1551 = sbr.rel target = $region92
                $region97: #{autoencoder_forward.1} parent=89 // loop_exit
                  _
                %s1631 = sshrl.u32 %s1428, 5
                %s1632 = sand.u32 %s1428, 31
                %s1633 = smul.u32 %s1631, 32
                %s1634 = smul.u32 8, %s1633
                %s1635 = scalar_lea.vmem %s1421, %s1634 [#allocation2]
                %s1636 = smul.u32 8, %s1633
                %s1637 = scalar_lea.vmem %s1432, %s1636
                // While loop
                $region98: #{autoencoder_forward.1} parent=89 // loop_pre_header
                  _
                $region99: #{autoencoder_forward.1} parent=89 // loop_header
                  %s1639 = sphi 0, %s1641
                  %p1640 = scmp.ge.s32.totalorder %s1639, %s1632
                  %s1644 = sphi 0, %s1651
                  %s1645 = sphi %s1635, %s1654
                  %s1646 = sphi %s1637, %s1655
                $region100: #{autoencoder_forward.1} parent=89 // loop_header_branch
                  %1643 = sbr.rel (%p1640) target = $region104
                $region101: #{autoencoder_forward.1} parent=89 // loop_body
                  %v1647 = vld [vmem:[%s1645] sm:$0xff]
                  %1648 = vst [vmem:[%s1646] sm:$0xff] %v1647
                  %s1649 = sadd.s32 1, %s1644
                  %p1650 = scmp.ge.s32.totalorder %s1649, %s1632
                  %s1651 = scalar_select %p1650, 0, %s1649
                  %s1652 = smul.u32 %s1651, 8
                  %s1653 = smul.u32 %s1651, 8
                  %s1654 = scalar_lea.vmem %s1635, %s1652 [#allocation2]
                  %s1655 = scalar_lea.vmem %s1637, %s1653
                $region102: #{autoencoder_forward.1} parent=89 // loop_footer
                  %s1641 = sadd.s32 %s1639, 1
                $region103: #{autoencoder_forward.1} parent=89 // loop_footer_branch
                  %1638 = sbr.rel target = $region99
                $region104: #{autoencoder_forward.1} parent=89 // loop_exit
                  _
              $region90: #{autoencoder_forward.1} parent=67 // pred_fallthru
                _
              // Predicated region
              $region105: #{autoencoder_forward.1} parent=67 // pred_check
                _
              $region106: #{autoencoder_forward.1} parent=67 // pred_check_branch
                %1657 = sbr.rel target = $region108
              $region107: #{autoencoder_forward.1} parent=67 // pred_region
                _
              $region108: #{autoencoder_forward.1} parent=67 // pred_fallthru
                _
            $region68: #{autoencoder_forward.1} parent=63 // pred_fallthru
              _
            // Predicated region
            $region69: #{autoencoder_forward.1} parent=63 // pred_check
              _
            $region70: #{autoencoder_forward.1} parent=63 // pred_check_branch
              %1439 = sbr.rel target = $region72
            $region71: #{autoencoder_forward.1} parent=63 // pred_region
              %s1441 = ssub.s32 256, 1
              %s1442 = sshrl.u32 %s1428, 5
              // While loop
              $region73: #{autoencoder_forward.1} parent=71 // loop_pre_header
                _
              $region74: #{autoencoder_forward.1} parent=71 // loop_header
                %s1444 = sphi 0, %s1446
                %p1445 = scmp.ge.s32.totalorder %s1444, %s1442
                %s1449 = sphi 0, %s1518
                %s1450 = sphi %s1421, %s1521
                %s1451 = sphi %s1432, %s1522
              $region75: #{autoencoder_forward.1} parent=71 // loop_header_branch
                %1448 = sbr.rel (%p1445) target = $region79
              $region76: #{autoencoder_forward.1} parent=71 // loop_body
                %v1452 = vld [vmem:[%s1450] sm:%s1441]
                %1453 = vst [vmem:[%s1451] sm:%s1441] %v1452
                %v1454 = vld [vmem:[%s1450 + $0x8] sm:%s1441]
                %1455 = vst [vmem:[%s1451 + $0x8] sm:%s1441] %v1454
                %v1456 = vld [vmem:[%s1450 + $0x10] sm:%s1441]
                %1457 = vst [vmem:[%s1451 + $0x10] sm:%s1441] %v1456
                %v1458 = vld [vmem:[%s1450 + $0x18] sm:%s1441]
                %1459 = vst [vmem:[%s1451 + $0x18] sm:%s1441] %v1458
                %v1460 = vld [vmem:[%s1450 + $0x20] sm:%s1441]
                %1461 = vst [vmem:[%s1451 + $0x20] sm:%s1441] %v1460
                %v1462 = vld [vmem:[%s1450 + $0x28] sm:%s1441]
                %1463 = vst [vmem:[%s1451 + $0x28] sm:%s1441] %v1462
                %v1464 = vld [vmem:[%s1450 + $0x30] sm:%s1441]
                %1465 = vst [vmem:[%s1451 + $0x30] sm:%s1441] %v1464
                %v1466 = vld [vmem:[%s1450 + $0x38] sm:%s1441]
                %1467 = vst [vmem:[%s1451 + $0x38] sm:%s1441] %v1466
                %v1468 = vld [vmem:[%s1450 + $0x40] sm:%s1441]
                %1469 = vst [vmem:[%s1451 + $0x40] sm:%s1441] %v1468
                %v1470 = vld [vmem:[%s1450 + $0x48] sm:%s1441]
                %1471 = vst [vmem:[%s1451 + $0x48] sm:%s1441] %v1470
                %v1472 = vld [vmem:[%s1450 + $0x50] sm:%s1441]
                %1473 = vst [vmem:[%s1451 + $0x50] sm:%s1441] %v1472
                %v1474 = vld [vmem:[%s1450 + $0x58] sm:%s1441]
                %1475 = vst [vmem:[%s1451 + $0x58] sm:%s1441] %v1474
                %v1476 = vld [vmem:[%s1450 + $0x60] sm:%s1441]
                %1477 = vst [vmem:[%s1451 + $0x60] sm:%s1441] %v1476
                %v1478 = vld [vmem:[%s1450 + $0x68] sm:%s1441]
                %1479 = vst [vmem:[%s1451 + $0x68] sm:%s1441] %v1478
                %v1480 = vld [vmem:[%s1450 + $0x70] sm:%s1441]
                %1481 = vst [vmem:[%s1451 + $0x70] sm:%s1441] %v1480
                %v1482 = vld [vmem:[%s1450 + $0x78] sm:%s1441]
                %1483 = vst [vmem:[%s1451 + $0x78] sm:%s1441] %v1482
                %v1484 = vld [vmem:[%s1450 + $0x80] sm:%s1441]
                %1485 = vst [vmem:[%s1451 + $0x80] sm:%s1441] %v1484
                %v1486 = vld [vmem:[%s1450 + $0x88] sm:%s1441]
                %1487 = vst [vmem:[%s1451 + $0x88] sm:%s1441] %v1486
                %v1488 = vld [vmem:[%s1450 + $0x90] sm:%s1441]
                %1489 = vst [vmem:[%s1451 + $0x90] sm:%s1441] %v1488
                %v1490 = vld [vmem:[%s1450 + $0x98] sm:%s1441]
                %1491 = vst [vmem:[%s1451 + $0x98] sm:%s1441] %v1490
                %v1492 = vld [vmem:[%s1450 + $0xa0] sm:%s1441]
                %1493 = vst [vmem:[%s1451 + $0xa0] sm:%s1441] %v1492
                %v1494 = vld [vmem:[%s1450 + $0xa8] sm:%s1441]
                %1495 = vst [vmem:[%s1451 + $0xa8] sm:%s1441] %v1494
                %v1496 = vld [vmem:[%s1450 + $0xb0] sm:%s1441]
                %1497 = vst [vmem:[%s1451 + $0xb0] sm:%s1441] %v1496
                %v1498 = vld [vmem:[%s1450 + $0xb8] sm:%s1441]
                %1499 = vst [vmem:[%s1451 + $0xb8] sm:%s1441] %v1498
                %v1500 = vld [vmem:[%s1450 + $0xc0] sm:%s1441]
                %1501 = vst [vmem:[%s1451 + $0xc0] sm:%s1441] %v1500
                %v1502 = vld [vmem:[%s1450 + $0xc8] sm:%s1441]
                %1503 = vst [vmem:[%s1451 + $0xc8] sm:%s1441] %v1502
                %v1504 = vld [vmem:[%s1450 + $0xd0] sm:%s1441]
                %1505 = vst [vmem:[%s1451 + $0xd0] sm:%s1441] %v1504
                %v1506 = vld [vmem:[%s1450 + $0xd8] sm:%s1441]
                %1507 = vst [vmem:[%s1451 + $0xd8] sm:%s1441] %v1506
                %v1508 = vld [vmem:[%s1450 + $0xe0] sm:%s1441]
                %1509 = vst [vmem:[%s1451 + $0xe0] sm:%s1441] %v1508
                %v1510 = vld [vmem:[%s1450 + $0xe8] sm:%s1441]
                %1511 = vst [vmem:[%s1451 + $0xe8] sm:%s1441] %v1510
                %v1512 = vld [vmem:[%s1450 + $0xf0] sm:%s1441]
                %1513 = vst [vmem:[%s1451 + $0xf0] sm:%s1441] %v1512
                %v1514 = vld [vmem:[%s1450 + $0xf8] sm:%s1441]
                %1515 = vst [vmem:[%s1451 + $0xf8] sm:%s1441] %v1514
                %s1516 = sadd.s32 1, %s1449
                %p1517 = scmp.ge.s32.totalorder %s1516, %s1442
                %s1518 = scalar_select %p1517, 0, %s1516
                %s1519 = smul.u32 %s1518, 256
                %s1520 = smul.u32 %s1518, 256
                %s1521 = scalar_lea.vmem %s1421, %s1519 [#allocation2]
                %s1522 = scalar_lea.vmem %s1432, %s1520
              $region77: #{autoencoder_forward.1} parent=71 // loop_footer
                %s1446 = sadd.s32 %s1444, 1
              $region78: #{autoencoder_forward.1} parent=71 // loop_footer_branch
                %1443 = sbr.rel target = $region74
              $region79: #{autoencoder_forward.1} parent=71 // loop_exit
                _
              %s1523 = sshrl.u32 %s1428, 5
              %s1524 = sand.u32 %s1428, 31
              %s1525 = smul.u32 %s1523, 32
              %s1526 = smul.u32 8, %s1525
              %s1527 = scalar_lea.vmem %s1421, %s1526 [#allocation2]
              %s1528 = smul.u32 8, %s1525
              %s1529 = scalar_lea.vmem %s1432, %s1528
              // While loop
              $region80: #{autoencoder_forward.1} parent=71 // loop_pre_header
                _
              $region81: #{autoencoder_forward.1} parent=71 // loop_header
                %s1531 = sphi 0, %s1533
                %p1532 = scmp.ge.s32.totalorder %s1531, %s1524
                %s1536 = sphi 0, %s1543
                %s1537 = sphi %s1527, %s1546
                %s1538 = sphi %s1529, %s1547
              $region82: #{autoencoder_forward.1} parent=71 // loop_header_branch
                %1535 = sbr.rel (%p1532) target = $region86
              $region83: #{autoencoder_forward.1} parent=71 // loop_body
                %v1539 = vld [vmem:[%s1537] sm:%s1441]
                %1540 = vst [vmem:[%s1538] sm:%s1441] %v1539
                %s1541 = sadd.s32 1, %s1536
                %p1542 = scmp.ge.s32.totalorder %s1541, %s1524
                %s1543 = scalar_select %p1542, 0, %s1541
                %s1544 = smul.u32 %s1543, 8
                %s1545 = smul.u32 %s1543, 8
                %s1546 = scalar_lea.vmem %s1527, %s1544 [#allocation2]
                %s1547 = scalar_lea.vmem %s1529, %s1545
              $region84: #{autoencoder_forward.1} parent=71 // loop_footer
                %s1533 = sadd.s32 %s1531, 1
              $region85: #{autoencoder_forward.1} parent=71 // loop_footer_branch
                %1530 = sbr.rel target = $region81
              $region86: #{autoencoder_forward.1} parent=71 // loop_exit
                _
            $region72: #{autoencoder_forward.1} parent=63 // pred_fallthru
              _
          $region64: #{autoencoder_forward.1} parent=59 // pred_fallthru
            _
          %1658 = vnop
        $region60: #{autoencoder_forward.1} parent=55 // pred_fallthru
          _
      $region56: #{autoencoder_forward.1} parent=5 // pred_fallthru
        _
      %p1659 = scmp.le.s32.totalorder 2, %s15
      // Predicated region
      $region109: #{autoencoder_forward.1} parent=5 // pred_check
        %p1660 = pneg %p1659
      $region110: #{autoencoder_forward.1} parent=5 // pred_check_branch
        %1662 = sbr.rel (%p1660) target = $region112
      $region111: #{autoencoder_forward.1} parent=5 // pred_region
        %s1663 = ssub.s32 %s15, 2
        // Predicated region
        $region113: #{autoencoder_forward.1} parent=111 // pred_check
          %p1664 = pneg %p238
        $region114: #{autoencoder_forward.1} parent=111 // pred_check_branch
          %1666 = sbr.rel (%p1664) target = $region116
        $region115: #{autoencoder_forward.1} parent=111 // pred_region
          %s1667 = sand.u32 %s223, 1
          %s1668 = sand.u32 %s223, 1
          %s1669 = smul.addr %s1668, 256
          %s1670 = scalar_lea.vmem [#allocation2], %s1669
        $region116: #{autoencoder_forward.1} parent=111 // pred_fallthru
          _
      $region112: #{autoencoder_forward.1} parent=5 // pred_fallthru
        _
    $region6: #{autoencoder_forward.1} parent=1 // loop_footer
      %s19 = sadd.s32 1, %s15
    $region7: #{autoencoder_forward.1} parent=1 // loop_footer_branch
      %14 = sbr.rel target = $region3
    $region8: #{autoencoder_forward.1} parent=1 // loop_exit
      _

</llo_original>
